<compile_context>
chip_gen: v6e
topology: v6e:2x2x1
jax: 0.10.0
libtpu: 0.0.40
codegen_flags: <defaults>
</compile_context>

<pallas_src>
import functools
import math
import numpy as np
import jax
import jax.numpy as jnp
from jax.experimental import pallas as pl
from jax.experimental.pallas import tpu as pltpu

# ----------------------------- config (small synthetic SSD) -----------------------------
NUM_CLASSES = 8
IMAGE_SIZE = 64
MATCH_IOU_THR = 0.5
NEG_RATE = 0.5
VAR0 = 1.0
VAR1 = 1.0

ANCHOR_RATIOS = [[2], [2, 3], [2]]
FEATURE_SHAPES = [(4, 4), (2, 2), (1, 1)]
FEATURE_SCALES = [(8, 8), (16, 16), (32, 32)]
ANCHOR_SIZE_LIMITS = [(30, 60), (60, 111), (111, 162)]


# ----------------------------- prior generation (numpy, deterministic) ------------------
def generate_cell_boxes(ratios, size_limit):
    boxes = []
    _min, _max = size_limit
    s = float(_min)
    boxes.append([0.0, 0.0, s, s])
    s = math.sqrt(_min * _max)
    boxes.append([0.0, 0.0, s, s])
    for ratio in ratios:
        r = math.sqrt(ratio)
        a = r * _min
        b = (1.0 / r) * _min
        boxes.append([0.0, 0.0, a, b])
        boxes.append([0.0, 0.0, b, a])
    return np.asarray(boxes, dtype=np.float32)


def generate_anchor_boxes(anchor_ratios, feature_scales, feature_shapes,
                          anchor_size_limits, image_size):
    all_boxes = []
    for i in range(len(feature_shapes)):
        x, y = feature_shapes[i]
        sx, sy = feature_scales[i]
        shift_x = np.arange(0, x, dtype=np.float32) * sx
        shift_y = np.arange(0, y, dtype=np.float32) * sy
        sy_g, sx_g = np.meshgrid(shift_y, shift_x, indexing="ij")  # torch.meshgrid default 'ij'
        sx_f = sx_g.reshape(-1)
        sy_f = sy_g.reshape(-1)
        shifts = np.stack([sx_f, sy_f, sx_f, sy_f], axis=1)
        cell = generate_cell_boxes(anchor_ratios[i], anchor_size_limits[i])
        b = (shifts.reshape(-1, 1, 4) + cell.reshape(1, -1, 4)).reshape(-1, 4)
        all_boxes.append(b)
    boxes = np.concatenate(all_boxes, axis=0)
    return np.clip(boxes, 0.0, float(image_size)).astype(np.float32)


def xyxy_to_cxcywh(b):
    cx = (b[:, 0] + b[:, 2]) / 2.0
    cy = (b[:, 1] + b[:, 3]) / 2.0
    w = b[:, 2] - b[:, 0]
    h = b[:, 3] - b[:, 1]
    return np.stack([cx, cy, w, h], axis=1).astype(np.float32)


# ----------------------------- Pallas kernels -------------------------------------------
def match_encode_kernel(truths_ref, priors_ref, conf_ref, loc_ref, out_ref, *,
                        n_valid, n_truth, n_cls, var0, var1, iou_thr):
    """Fused SSD matching / encoding / smooth-L1 / CE for one image (lane-dense over priors).

    truths_ref : VMEM (1, T, 8)    [x1, y1, x2, y2, label, 0, 0, 0] per ground-truth box
    priors_ref : VMEM (8, Npad)    rows: x1, y1, x2, y2, cx, cy, 1/(var0*w), 1/(var0*h)
    conf_ref   : VMEM (1, C, Npad) class logits, classes on sublanes, priors on lanes
    loc_ref    : VMEM (1, 4, Npad) predicted offsets, coords on sublanes
    out_ref    : VMEM (1, 4, Npad) rows: pos, ce, smooth-L1 sum, hnm key
    """
    npad = priors_ref.shape[1]
    neg_big = -1e9

    pr = priors_ref[...]                                              # (8, Npad)
    px1, py1, px2, py2 = pr[0:1, :], pr[1:2, :], pr[2:3, :], pr[3:4, :]
    pcx, pcy = pr[4:5, :], pr[5:6, :]
    inv_v0w, inv_v0h = pr[6:7, :], pr[7:8, :]
    area_p = (px2 - px1) * (py2 - py1)

    tr = truths_ref[0]                                                # (T, 8)
    tx1, ty1 = tr[:, 0:1], tr[:, 1:2]
    tx2, ty2 = tr[:, 2:3], tr[:, 3:4]
    tlab = tr[:, 4:5]

    lane = jax.lax.broadcasted_iota(jnp.int32, (n_truth, npad), 1)
    tidx = jax.lax.broadcasted_iota(jnp.int32, (n_truth, npad), 0)
    valid = lane < n_valid

    # ---- generalized IoU of every truth vs every prior, one (T, Npad) tile
    area_t = (tx2 - tx1) * (ty2 - ty1)
    ix1 = jnp.maximum(px1, tx1)
    iy1 = jnp.maximum(py1, ty1)
    ix2 = jnp.minimum(px2, tx2)
    iy2 = jnp.minimum(py2, ty2)
    inter = jnp.maximum(ix2 - ix1, 0.0) * jnp.maximum(iy2 - iy1, 0.0)
    union = area_t + area_p - inter
    iou = inter / union
    ex1 = jnp.minimum(px1, tx1)
    ey1 = jnp.minimum(py1, ty1)
    ex2 = jnp.maximum(px2, tx2)
    ey2 = jnp.maximum(py2, ty2)
    enclose = jnp.maximum(ex2 - ex1, 0.0) * jnp.maximum(ey2 - ey1, 0.0)
    g = iou - (enclose - union) / enclose
    g = jnp.where(valid, g, neg_big)

    # ---- per-prior best truth (one sublane reduce pair), first max wins on ties
    best_score = jnp.max(g, axis=0, keepdims=True)                    # (1, Npad)
    best_idx = jnp.min(jnp.where(g >= best_score, tidx, n_truth),
                       axis=0, keepdims=True)                         # (1, Npad) i32

    # ---- per-truth best prior (one lane reduce pair) + force-match, last truth wins
    gmax_t = jnp.max(g, axis=1, keepdims=True)                        # (T, 1)
    first_lane = jnp.min(jnp.where(g >= gmax_t, lane, npad),
                         axis=1, keepdims=True)                       # (T, 1)
    onehot = lane == first_lane                                       # (T, Npad)
    forced = jnp.max(onehot.astype(jnp.int32), axis=0, keepdims=True) > 0
    forced_idx = jnp.max(jnp.where(onehot, tidx, -1), axis=0, keepdims=True)

    score = best_score + jnp.where(forced, 1.0, 0.0)
    midx = jnp.where(forced, forced_idx, best_idx)                    # (1, Npad)

    # ---- matched gt gather: one masked sublane-sum per quantity
    selmask = tidx == midx                                            # (T, Npad)

    def gather(v):                                                    # v: (T, 1)
        return jnp.sum(jnp.where(selmask, v, 0.0), axis=0, keepdims=True)

    mcx = gather((tx1 + tx2) * 0.5)
    mcy = gather((ty1 + ty2) * 0.5)
    mw = gather(tx2 - tx1)
    mh = gather(ty2 - ty1)
    lab = jnp.where(score < iou_thr, 0.0, gather(tlab))               # (1, Npad) f32
    posf = jnp.where(lab > 0.0, 1.0, 0.0)

    # ---- prior-box encoding + per-prior smooth-L1 sum of (loc - encoded gt)
    g_cx = (mcx - pcx) * inv_v0w
    g_cy = (mcy - pcy) * inv_v0h
    g_w = jnp.log(mw * (inv_v0w * var0)) * (1.0 / var1)
    g_h = jnp.log(mh * (inv_v0h * var0)) * (1.0 / var1)
    l = loc_ref[0]                                                    # (4, Npad)

    def smooth_l1(d):
        ad = jnp.abs(d)
        return jnp.where(ad < 1.0, 0.5 * d * d, ad - 0.5)

    sl1 = (smooth_l1(l[0:1, :] - g_cx) + smooth_l1(l[1:2, :] - g_cy) +
           smooth_l1(l[2:3, :] - g_w) + smooth_l1(l[3:4, :] - g_h))

    # ---- per-prior cross-entropy: whole-block max / exp / sum over class sublanes
    c = conf_ref[0]                                                   # (C, Npad)
    cmax = jnp.max(c, axis=0, keepdims=True)
    ssum = jnp.sum(jnp.exp(c - cmax), axis=0, keepdims=True)
    cls = jax.lax.broadcasted_iota(jnp.int32, (n_cls, npad), 0).astype(jnp.float32)
    picked = jnp.sum(jnp.where(cls == lab, c, 0.0), axis=0, keepdims=True)
    ce = cmax + jnp.log(ssum) - picked

    # ---- hard-negative-mining key: CE with positives zeroed, padded lanes sunk
    hnm = jnp.where(posf > 0.0, 0.0, ce)
    hnm = jnp.where(lane[0:1, :] < n_valid, hnm, -1e30)

    out_ref[0] = jnp.concatenate([posf, ce, sl1, hnm], axis=0)        # one (4, Npad) store


def rank_reduce_kernel(packed_ref, out_ref, *, batch, npad, total_valid, neg_rate):
    """Counting-rank hard-negative mining + masked reductions -> scalar loss.

    packed_ref : VMEM (B, 4, Npad) rows per image: pos, ce, smooth-L1, hnm key
    out_ref    : VMEM (1, 128)     scalar loss broadcast across the lane
    """
    pos_rows, ce_rows, hnm_rows = [], [], []
    num_pos = jnp.float32(0.0)
    loc_sum = jnp.float32(0.0)
    for b in range(batch):                                            # static, tiny batch
        blk = packed_ref[b]                                           # (4, Npad)
        pos_b = blk[0:1, :]
        ce_b = blk[1:2, :]
        sl1_b = blk[2:3, :]
        hnm_b = blk[3:4, :]
        num_pos = num_pos + jnp.sum(pos_b)
        loc_sum = loc_sum + jnp.sum(sl1_b * pos_b)
        pos_rows.append(pos_b)
        ce_rows.append(ce_b)
        hnm_rows.append(hnm_b)

    pos_row = jnp.concatenate(pos_rows, axis=1)                       # (1, M) lane-dense
    ce_row = jnp.concatenate(ce_rows, axis=1)
    hnm_row = jnp.concatenate(hnm_rows, axis=1)

    num_neg = jnp.minimum(neg_rate * num_pos, jnp.float32(total_valid - 1))

    # counting rank: rank_i = #{j : hnm_j > hnm_i}.  Ties only occur at value 0 (positives)
    # and -1e30 (padding), never at the selection cutoff for random logits.
    m = batch * npad
    ii = jax.lax.broadcasted_iota(jnp.int32, (m, m), 0)
    jj = jax.lax.broadcasted_iota(jnp.int32, (m, m), 1)
    diag = ii == jj
    hnm_col = jnp.sum(jnp.where(diag, hnm_row, 0.0), axis=1, keepdims=True)       # (M, 1)
    count = jnp.sum((hnm_row > hnm_col).astype(jnp.float32), axis=1, keepdims=True)
    neg_col = (count < num_neg).astype(jnp.float32)                                # (M, 1)
    neg_row = jnp.sum(jnp.where(diag, neg_col, 0.0), axis=0, keepdims=True)        # (1, M)

    sel = pos_row + neg_row * (1.0 - pos_row)                          # pos OR neg, in {0,1}
    sel_cnt = jnp.sum(sel)
    ce_sum = jnp.sum(ce_row * sel)
    loss = ce_sum / sel_cnt + loc_sum / (num_pos * 4.0)
    out_ref[...] = jnp.zeros(out_ref.shape, out_ref.dtype) + loss


# ----------------------------- SSDLoss forward (Pallas wrapper) -------------------------
@jax.jit
def ssd_loss_pallas(conf, loc, bboxes, gt_labels, priors_xyxy):
    B, N, C = conf.shape
    T = bboxes.shape[1]
    Npad = ((N + 127) // 128) * 128

    # static (8, Npad) priors block: x1, y1, x2, y2, cx, cy, 1/(var0*w), 1/(var0*h)
    # (padded priors are harmless dummy [0,0,1,1] boxes so all kernel math stays finite)
    pad_xyxy = jnp.tile(jnp.array([[0.0, 0.0, 1.0, 1.0]], jnp.float32), (Npad - N, 1))
    pxy = jnp.concatenate([priors_xyxy, pad_xyxy], axis=0)            # (Npad, 4)
    px1, py1, px2, py2 = pxy[:, 0], pxy[:, 1], pxy[:, 2], pxy[:, 3]
    priors_blk = jnp.stack(
        [px1, py1, px2, py2,
         (px1 + px2) * 0.5, (py1 + py2) * 0.5,
         1.0 / (VAR0 * (px2 - px1)), 1.0 / (VAR0 * (py2 - py1))], axis=0)  # (8, Npad)

    # (B, T, 8) ground-truth block: xyxy coords + label (as f32) + padding
    truths_blk = jnp.concatenate(
        [bboxes, gt_labels.astype(jnp.float32)[..., None],
         jnp.zeros((B, T, 3), jnp.float32)], axis=-1)

    # lane-dense predictions: classes / coords on sublanes, priors on lanes
    conf_t = jnp.transpose(jnp.pad(conf, ((0, 0), (0, Npad - N), (0, 0))), (0, 2, 1))
    loc_t = jnp.transpose(jnp.pad(loc, ((0, 0), (0, Npad - N), (0, 0))), (0, 2, 1))

    # ---- kernel A: fused GIoU matching + encode + smooth-L1 + CE, one image per grid step
    kern_a = functools.partial(match_encode_kernel, n_valid=N, n_truth=T, n_cls=C,
                               var0=VAR0, var1=VAR1, iou_thr=MATCH_IOU_THR)
    packed = pl.pallas_call(
        kern_a,
        out_shape=jax.ShapeDtypeStruct((B, 4, Npad), jnp.float32),
        grid=(B,),
        in_specs=[pl.BlockSpec((1, T, 8), lambda b: (b, 0, 0)),
                  pl.BlockSpec((8, Npad), lambda b: (0, 0)),
                  pl.BlockSpec((1, C, Npad), lambda b: (b, 0, 0)),
                  pl.BlockSpec((1, 4, Npad), lambda b: (b, 0, 0))],
        out_specs=pl.BlockSpec((1, 4, Npad), lambda b: (b, 0, 0)),
        compiler_params=pltpu.CompilerParams(dimension_semantics=("parallel",)),
    )(truths_blk, priors_blk, conf_t, loc_t)

    # ---- kernel B: counting-rank hard-negative mining + reductions -> scalar loss
    kern_b = functools.partial(rank_reduce_kernel, batch=B, npad=Npad,
                               total_valid=B * N, neg_rate=NEG_RATE)
    loss_arr = pl.pallas_call(
        kern_b,
        out_shape=jax.ShapeDtypeStruct((1, 128), jnp.float32),
        grid=(1,),
        in_specs=[pl.BlockSpec((B, 4, Npad), lambda i: (0, 0, 0))],
        out_specs=pl.BlockSpec((1, 128), lambda i: (0, 0)),
    )(packed)
    return loss_arr[0, 0]


# ----------------------------- pure-JAX reference ---------------------------------------
def _giou_ref(boxes1, boxes2):
    area1 = (boxes1[:, 2] - boxes1[:, 0]) * (boxes1[:, 3] - boxes1[:, 1])
    area2 = (boxes2[:, 2] - boxes2[:, 0]) * (boxes2[:, 3] - boxes2[:, 1])
    lt = jnp.maximum(boxes1[:, None, :2], boxes2[None, :, :2])
    rb = jnp.minimum(boxes1[:, None, 2:], boxes2[None, :, 2:])
    wh = jnp.maximum(rb - lt, 0.0)
    inter = wh[..., 0] * wh[..., 1]
    union = area1[:, None] + area2[None, :] - inter
    iou = inter / union
    lti = jnp.minimum(boxes1[:, None, :2], boxes2[None, :, :2])
    rbi = jnp.maximum(boxes1[:, None, 2:], boxes2[None, :, 2:])
    whi = jnp.maximum(rbi - lti, 0.0)
    areai = whi[..., 0] * whi[..., 1]
    return iou - (areai - union) / areai


def reference_loss(conf, loc, bboxes, gt_labels, priors_xyxy, priors_c):
    B, N, C = conf.shape
    T = bboxes.shape[1]
    matched_list, lab_list = [], []
    for b in range(B):
        g = _giou_ref(bboxes[b], priors_xyxy)
        best_box_idx = jnp.argmax(g, axis=1)
        best_score = jnp.max(g, axis=0)
        best_idx = jnp.argmax(g, axis=0)
        best_score = best_score.at[best_box_idx].set(best_score[best_box_idx] + 1.0)
        for i in range(T):
            best_idx = best_idx.at[best_box_idx[i]].set(i)
        m = bboxes[b][best_idx]
        l = gt_labels[b][best_idx]
        l = jnp.where(best_score < MATCH_IOU_THR, 0, l)
        matched_list.append(m)
        lab_list.append(l)
    matched = jnp.concatenate(matched_list, axis=0)
    labels = jnp.concatenate(lab_list, axis=0)

    conff = conf.reshape(-1, C)
    locf = loc.reshape(-1, 4)
    prc = jnp.tile(priors_c, (B, 1))

    g_cxcy = ((matched[:, :2] + matched[:, 2:]) / 2.0 - prc[:, :2]) / (VAR0 * prc[:, 2:])
    g_wh = jnp.log((matched[:, 2:] - matched[:, :2]) / prc[:, 2:]) / VAR1
    enc = jnp.concatenate([g_cxcy, g_wh], axis=1)

    pos = labels > 0
    m = jnp.max(conff, axis=1, keepdims=True)
    lse = (m + jnp.log(jnp.sum(jnp.exp(conff - m), axis=1, keepdims=True)))[:, 0]
    picked = jnp.take_along_axis(conff, labels[:, None], axis=1)[:, 0]
    ce = lse - picked

    hnm = jnp.where(pos, 0.0, ce)
    order = jnp.argsort(-hnm)
    rank = jnp.argsort(order)
    num_pos = jnp.sum(pos)
    num_neg = jnp.minimum(NEG_RATE * num_pos.astype(jnp.float32), jnp.float32(B * N - 1))
    neg = rank.astype(jnp.float32) < num_neg
    sel = pos | neg

    loss_conf = jnp.sum(jnp.where(sel, ce, 0.0)) / jnp.sum(sel)
    d = locf - enc
    ad = jnp.abs(d)
    sl1 = jnp.where(ad < 1.0, 0.5 * d * d, ad - 0.5)
    loss_loc = jnp.sum(sl1 * pos[:, None]) / (jnp.sum(pos) * 4.0)
    return loss_conf + loss_loc


# ----------------------------- main ------------------------------------------------------
if __name__ == "__main__":
    priors_np = generate_anchor_boxes(ANCHOR_RATIOS, FEATURE_SCALES, FEATURE_SHAPES,
                                      ANCHOR_SIZE_LIMITS, IMAGE_SIZE)
    priors_xyxy = jnp.asarray(priors_np, jnp.float32)
    priors_c = jnp.asarray(xyxy_to_cxcywh(priors_np), jnp.float32)
    N = priors_xyxy.shape[0]          # 92 priors for this small config
    B, T = 2, 4

    key = jax.random.PRNGKey(0)
    k1, k2, k3, k4, k5 = jax.random.split(key, 5)
    xy1 = jax.random.uniform(k1, (B, T, 2), jnp.float32, 0.0, IMAGE_SIZE * 0.55)
    wh = jax.random.uniform(k2, (B, T, 2), jnp.float32, IMAGE_SIZE * 0.15, IMAGE_SIZE * 0.5)
    xy2 = jnp.clip(xy1 + wh, 0.0, float(IMAGE_SIZE))
    bboxes = jnp.concatenate([xy1, xy2], axis=-1)                     # (B, T, 4) xyxy gt boxes
    gt_labels = jax.random.randint(k3, (B, T), 1, NUM_CLASSES, jnp.int32)
    conf = jax.random.normal(k4, (B, N, NUM_CLASSES), jnp.float32)    # predicted class logits
    loc = 0.1 * jax.random.normal(k5, (B, N, 4), jnp.float32)         # predicted box offsets

    loss = ssd_loss_pallas(conf, loc, bboxes, gt_labels, priors_xyxy)
    loss = jax.block_until_ready(loss)

    ref = reference_loss(conf, loc, bboxes, gt_labels, priors_xyxy, priors_c)
    np.testing.assert_allclose(np.asarray(loss), np.asarray(ref), rtol=2e-3, atol=2e-3)
    print("KERNEL_OK")
</pallas_src>

<mosaic_0001>
module attributes {stable_mosaic.version = 11 : i64} {
  func.func @rank_reduce_kernel(%arg0: i32, %arg1: memref<2x4x128xf32, #tpu.memory_space<vmem>>, %arg2: memref<1x128xf32, #tpu.memory_space<vmem>>) attributes {dimension_semantics = [#tpu.dimension_semantics<arbitrary>], iteration_bounds = array<i64: 1>, scalar_prefetch = 0 : i64, scratch_operands = 0 : i64, tpu.core_type = #tpu.core_type<tc>, window_params = [{pipeline_mode = #tpu.pipeline_mode<synchronous>, transform_indices = @transform_0, window_bounds = array<i64: 2, 4, 128>}, {pipeline_mode = #tpu.pipeline_mode<synchronous>, transform_indices = @transform_1, window_bounds = array<i64: 1, 128>}]} {
    %c0 = arith.constant 0 : index
    %c0_0 = arith.constant 0 : index
    %c0_1 = arith.constant 0 : index
    %0 = vector.load %arg1[%c0, %c0_0, %c0_1] : memref<2x4x128xf32, #tpu.memory_space<vmem>>, vector<1x4x128xf32>
    %1 = vector.shape_cast %0 : vector<1x4x128xf32> to vector<4x128xf32>
    %2 = vector.extract_strided_slice %1 {offsets = [0, 0], sizes = [1, 128], strides = [1, 1]} : vector<4x128xf32> to vector<1x128xf32>
    %3 = vector.extract_strided_slice %1 {offsets = [1, 0], sizes = [1, 128], strides = [1, 1]} : vector<4x128xf32> to vector<1x128xf32>
    %4 = vector.extract_strided_slice %1 {offsets = [2, 0], sizes = [1, 128], strides = [1, 1]} : vector<4x128xf32> to vector<1x128xf32>
    %5 = vector.extract_strided_slice %1 {offsets = [3, 0], sizes = [1, 128], strides = [1, 1]} : vector<4x128xf32> to vector<1x128xf32>
    %6 = vector.shape_cast %2 : vector<1x128xf32> to vector<1x1x128xf32>
    %cst = arith.constant dense<0.000000e+00> : vector<1xf32>
    %7 = vector.multi_reduction <add>, %6, %cst [1, 2] : vector<1x1x128xf32> to vector<1xf32>
    %8 = vector.shape_cast %7 : vector<1xf32> to vector<1x1x1xf32>
    %9 = vector.extract %8[0, 0, 0] : f32 from vector<1x1x1xf32>
    %cst_2 = arith.constant 0.000000e+00 : f32
    %10 = arith.addf %cst_2, %9 : f32
    %11 = arith.mulf %4, %2 : vector<1x128xf32>
    %12 = vector.shape_cast %11 : vector<1x128xf32> to vector<1x1x128xf32>
    %cst_3 = arith.constant dense<0.000000e+00> : vector<1xf32>
    %13 = vector.multi_reduction <add>, %12, %cst_3 [1, 2] : vector<1x1x128xf32> to vector<1xf32>
    %14 = vector.shape_cast %13 : vector<1xf32> to vector<1x1x1xf32>
    %15 = vector.extract %14[0, 0, 0] : f32 from vector<1x1x1xf32>
    %cst_4 = arith.constant 0.000000e+00 : f32
    %16 = arith.addf %cst_4, %15 : f32
    %c1 = arith.constant 1 : index
    %c0_5 = arith.constant 0 : index
    %c0_6 = arith.constant 0 : index
    %17 = vector.load %arg1[%c1, %c0_5, %c0_6] : memref<2x4x128xf32, #tpu.memory_space<vmem>>, vector<1x4x128xf32>
    %18 = vector.shape_cast %17 : vector<1x4x128xf32> to vector<4x128xf32>
    %19 = vector.extract_strided_slice %18 {offsets = [0, 0], sizes = [1, 128], strides = [1, 1]} : vector<4x128xf32> to vector<1x128xf32>
    %20 = vector.extract_strided_slice %18 {offsets = [1, 0], sizes = [1, 128], strides = [1, 1]} : vector<4x128xf32> to vector<1x128xf32>
    %21 = vector.extract_strided_slice %18 {offsets = [2, 0], sizes = [1, 128], strides = [1, 1]} : vector<4x128xf32> to vector<1x128xf32>
    %22 = vector.extract_strided_slice %18 {offsets = [3, 0], sizes = [1, 128], strides = [1, 1]} : vector<4x128xf32> to vector<1x128xf32>
    %23 = vector.shape_cast %19 : vector<1x128xf32> to vector<1x1x128xf32>
    %cst_7 = arith.constant dense<0.000000e+00> : vector<1xf32>
    %24 = vector.multi_reduction <add>, %23, %cst_7 [1, 2] : vector<1x1x128xf32> to vector<1xf32>
    %25 = vector.shape_cast %24 : vector<1xf32> to vector<1x1x1xf32>
    %26 = vector.extract %25[0, 0, 0] : f32 from vector<1x1x1xf32>
    %27 = arith.addf %10, %26 : f32
    %28 = arith.mulf %21, %19 : vector<1x128xf32>
    %29 = vector.shape_cast %28 : vector<1x128xf32> to vector<1x1x128xf32>
    %cst_8 = arith.constant dense<0.000000e+00> : vector<1xf32>
    %30 = vector.multi_reduction <add>, %29, %cst_8 [1, 2] : vector<1x1x128xf32> to vector<1xf32>
    %31 = vector.shape_cast %30 : vector<1xf32> to vector<1x1x1xf32>
    %32 = vector.extract %31[0, 0, 0] : f32 from vector<1x1x1xf32>
    %33 = arith.addf %16, %32 : f32
    %34 = tpu.concatenate %2, %19 in 1 : vector<1x128xf32>, vector<1x128xf32> -> vector<1x256xf32>
    %35 = tpu.concatenate %3, %20 in 1 : vector<1x128xf32>, vector<1x128xf32> -> vector<1x256xf32>
    %36 = tpu.concatenate %5, %22 in 1 : vector<1x128xf32>, vector<1x128xf32> -> vector<1x256xf32>
    %cst_9 = arith.constant 5.000000e-01 : f32
    %37 = arith.mulf %cst_9, %27 : f32
    %cst_10 = arith.constant 1.830000e+02 : f32
    %38 = arith.minimumf %37, %cst_10 : f32
    %39 = tpu.iota {dimensions = array<i32: 0>} : vector<256x256xi32>
    %40 = tpu.iota {dimensions = array<i32: 1>} : vector<256x256xi32>
    %41 = arith.cmpi eq, %39, %40 : vector<256x256xi32>
    %cst_11 = arith.constant 0.000000e+00 : f32
    %42 = vector.shape_cast %36 : vector<1x256xf32> to vector<1x256xf32>
    %43 = vector.broadcast %42 : vector<1x256xf32> to vector<256x256xf32>
    %44 = vector.broadcast %cst_11 : f32 to vector<256x256xf32>
    %45 = arith.select %41, %43, %44 : vector<256x256xi1>, vector<256x256xf32>
    %cst_12 = arith.constant dense<0.000000e+00> : vector<256xf32>
    %46 = vector.multi_reduction <add>, %45, %cst_12 [1] : vector<256x256xf32> to vector<256xf32>
    %47 = vector.shape_cast %46 : vector<256xf32> to vector<256x1xf32>
    %48 = vector.broadcast %36 : vector<1x256xf32> to vector<256x256xf32>
    %49 = vector.broadcast %47 : vector<256x1xf32> to vector<256x256xf32>
    %50 = arith.cmpf ogt, %48, %49 : vector<256x256xf32>
    %51 = arith.extui %50 : vector<256x256xi1> to vector<256x256xi32>
    %52 = arith.sitofp %51 : vector<256x256xi32> to vector<256x256xf32>
    %cst_13 = arith.constant dense<0.000000e+00> : vector<256xf32>
    %53 = vector.multi_reduction <add>, %52, %cst_13 [1] : vector<256x256xf32> to vector<256xf32>
    %54 = vector.shape_cast %53 : vector<256xf32> to vector<256x1xf32>
    %55 = vector.broadcast %38 : f32 to vector<256x1xf32>
    %56 = arith.cmpf olt, %54, %55 : vector<256x1xf32>
    %57 = arith.extui %56 : vector<256x1xi1> to vector<256x1xi32>
    %58 = arith.sitofp %57 : vector<256x1xi32> to vector<256x1xf32>
    %cst_14 = arith.constant 0.000000e+00 : f32
    %59 = vector.shape_cast %58 : vector<256x1xf32> to vector<256x1xf32>
    %60 = vector.broadcast %59 : vector<256x1xf32> to vector<256x256xf32>
    %61 = vector.broadcast %cst_14 : f32 to vector<256x256xf32>
    %62 = arith.select %41, %60, %61 : vector<256x256xi1>, vector<256x256xf32>
    %cst_15 = arith.constant dense<0.000000e+00> : vector<256xf32>
    %63 = vector.multi_reduction <add>, %62, %cst_15 [0] : vector<256x256xf32> to vector<256xf32>
    %64 = vector.shape_cast %63 : vector<256xf32> to vector<1x256xf32>
    %cst_16 = arith.constant 1.000000e+00 : f32
    %65 = vector.broadcast %cst_16 : f32 to vector<1x256xf32>
    %66 = arith.subf %65, %34 : vector<1x256xf32>
    %67 = arith.mulf %64, %66 : vector<1x256xf32>
    %68 = arith.addf %34, %67 : vector<1x256xf32>
    %69 = vector.shape_cast %68 : vector<1x256xf32> to vector<1x1x256xf32>
    %cst_17 = arith.constant dense<0.000000e+00> : vector<1xf32>
    %70 = vector.multi_reduction <add>, %69, %cst_17 [1, 2] : vector<1x1x256xf32> to vector<1xf32>
    %71 = vector.shape_cast %70 : vector<1xf32> to vector<1x1x1xf32>
    %72 = vector.extract %71[0, 0, 0] : f32 from vector<1x1x1xf32>
    %73 = arith.mulf %35, %68 : vector<1x256xf32>
    %74 = vector.shape_cast %73 : vector<1x256xf32> to vector<1x1x256xf32>
    %cst_18 = arith.constant dense<0.000000e+00> : vector<1xf32>
    %75 = vector.multi_reduction <add>, %74, %cst_18 [1, 2] : vector<1x1x256xf32> to vector<1xf32>
    %76 = vector.shape_cast %75 : vector<1xf32> to vector<1x1x1xf32>
    %77 = vector.extract %76[0, 0, 0] : f32 from vector<1x1x1xf32>
    %78 = arith.divf %77, %72 : f32
    %cst_19 = arith.constant 4.000000e+00 : f32
    %79 = arith.mulf %27, %cst_19 : f32
    %80 = arith.divf %33, %79 : f32
    %81 = arith.addf %78, %80 : f32
    %cst_20 = arith.constant 0.000000e+00 : f32
    %82 = vector.broadcast %cst_20 : f32 to vector<1x128xf32>
    %83 = vector.broadcast %81 : f32 to vector<1x128xf32>
    %84 = arith.addf %82, %83 : vector<1x128xf32>
    %c0_21 = arith.constant 0 : index
    %c0_22 = arith.constant 0 : index
    %85 = vector.load %arg2[%c0_21, %c0_22] : memref<1x128xf32, #tpu.memory_space<vmem>>, vector<1x128xf32>
    tpu.vector_store %arg2[%c0_21, %c0_22], %84 {strides = array<i32>} : memref<1x128xf32, #tpu.memory_space<vmem>>, vector<1x128xf32>,
    return
  }
  func.func @transform_0(%arg0: i32) -> (i32, i32, i32) {
    %c0_i32 = arith.constant 0 : i32
    %c0_i32_0 = arith.constant 0 : i32
    %c0_i32_1 = arith.constant 0 : i32
    %c0_i32_2 = arith.constant 0 : i32
    return %c0_i32, %c0_i32_0, %c0_i32_1 : i32, i32, i32
  }
  func.func @transform_1(%arg0: i32) -> (i32, i32) {
    %c0_i32 = arith.constant 0 : i32
    %c0_i32_0 = arith.constant 0 : i32
    %c0_i32_1 = arith.constant 0 : i32
    return %c0_i32, %c0_i32_0 : i32, i32
  }
}

module attributes {stable_mosaic.version = 11 : i64} {
  func.func @match_encode_kernel(%arg0: i32, %arg1: memref<1x4x8xf32, #tpu.memory_space<vmem>>, %arg2: memref<8x128xf32, #tpu.memory_space<vmem>>, %arg3: memref<1x8x128xf32, #tpu.memory_space<vmem>>, %arg4: memref<1x4x128xf32, #tpu.memory_space<vmem>>, %arg5: memref<1x4x128xf32, #tpu.memory_space<vmem>>) attributes {dimension_semantics = [#tpu.dimension_semantics<parallel>], iteration_bounds = array<i64: 2>, scalar_prefetch = 0 : i64, scratch_operands = 0 : i64, tpu.core_type = #tpu.core_type<tc>, window_params = [{transform_indices = @transform_0, window_bounds = array<i64: 1, 4, 8>}, {pipeline_mode = #tpu.pipeline_mode<synchronous>, transform_indices = @transform_1, window_bounds = array<i64: 8, 128>}, {transform_indices = @transform_2, window_bounds = array<i64: 1, 8, 128>}, {transform_indices = @transform_3, window_bounds = array<i64: 1, 4, 128>}, {transform_indices = @transform_4, window_bounds = array<i64: 1, 4, 128>}]} {
    %c0 = arith.constant 0 : index
    %c0_0 = arith.constant 0 : index
    %0 = vector.load %arg2[%c0, %c0_0] : memref<8x128xf32, #tpu.memory_space<vmem>>, vector<8x128xf32>
    %1 = vector.extract_strided_slice %0 {offsets = [0, 0], sizes = [1, 128], strides = [1, 1]} : vector<8x128xf32> to vector<1x128xf32>
    %2 = vector.extract_strided_slice %0 {offsets = [1, 0], sizes = [1, 128], strides = [1, 1]} : vector<8x128xf32> to vector<1x128xf32>
    %3 = vector.extract_strided_slice %0 {offsets = [2, 0], sizes = [1, 128], strides = [1, 1]} : vector<8x128xf32> to vector<1x128xf32>
    %4 = vector.extract_strided_slice %0 {offsets = [3, 0], sizes = [1, 128], strides = [1, 1]} : vector<8x128xf32> to vector<1x128xf32>
    %5 = vector.extract_strided_slice %0 {offsets = [4, 0], sizes = [1, 128], strides = [1, 1]} : vector<8x128xf32> to vector<1x128xf32>
    %6 = vector.extract_strided_slice %0 {offsets = [5, 0], sizes = [1, 128], strides = [1, 1]} : vector<8x128xf32> to vector<1x128xf32>
    %7 = vector.extract_strided_slice %0 {offsets = [6, 0], sizes = [1, 128], strides = [1, 1]} : vector<8x128xf32> to vector<1x128xf32>
    %8 = vector.extract_strided_slice %0 {offsets = [7, 0], sizes = [1, 128], strides = [1, 1]} : vector<8x128xf32> to vector<1x128xf32>
    %9 = arith.subf %3, %1 : vector<1x128xf32>
    %10 = arith.subf %4, %2 : vector<1x128xf32>
    %11 = arith.mulf %9, %10 : vector<1x128xf32>
    %c0_1 = arith.constant 0 : index
    %c0_2 = arith.constant 0 : index
    %c0_3 = arith.constant 0 : index
    %12 = vector.load %arg1[%c0_1, %c0_2, %c0_3] : memref<1x4x8xf32, #tpu.memory_space<vmem>>, vector<1x4x8xf32>
    %13 = vector.shape_cast %12 : vector<1x4x8xf32> to vector<4x8xf32>
    %14 = vector.extract_strided_slice %13 {offsets = [0, 0], sizes = [4, 1], strides = [1, 1]} : vector<4x8xf32> to vector<4x1xf32>
    %15 = vector.extract_strided_slice %13 {offsets = [0, 1], sizes = [4, 1], strides = [1, 1]} : vector<4x8xf32> to vector<4x1xf32>
    %16 = vector.extract_strided_slice %13 {offsets = [0, 2], sizes = [4, 1], strides = [1, 1]} : vector<4x8xf32> to vector<4x1xf32>
    %17 = vector.extract_strided_slice %13 {offsets = [0, 3], sizes = [4, 1], strides = [1, 1]} : vector<4x8xf32> to vector<4x1xf32>
    %18 = vector.extract_strided_slice %13 {offsets = [0, 4], sizes = [4, 1], strides = [1, 1]} : vector<4x8xf32> to vector<4x1xf32>
    %19 = tpu.iota {dimensions = array<i32: 1>} : vector<4x128xi32>
    %20 = tpu.iota {dimensions = array<i32: 0>} : vector<4x128xi32>
    %c92_i32 = arith.constant 92 : i32
    %21 = vector.broadcast %c92_i32 : i32 to vector<4x128xi32>
    %22 = arith.cmpi slt, %19, %21 : vector<4x128xi32>
    %23 = arith.subf %16, %14 : vector<4x1xf32>
    %24 = arith.subf %17, %15 : vector<4x1xf32>
    %25 = arith.mulf %23, %24 : vector<4x1xf32>
    %26 = vector.broadcast %1 : vector<1x128xf32> to vector<4x128xf32>
    %27 = vector.broadcast %14 : vector<4x1xf32> to vector<4x128xf32>
    %28 = arith.maximumf %26, %27 : vector<4x128xf32>
    %29 = vector.broadcast %2 : vector<1x128xf32> to vector<4x128xf32>
    %30 = vector.broadcast %15 : vector<4x1xf32> to vector<4x128xf32>
    %31 = arith.maximumf %29, %30 : vector<4x128xf32>
    %32 = vector.broadcast %3 : vector<1x128xf32> to vector<4x128xf32>
    %33 = vector.broadcast %16 : vector<4x1xf32> to vector<4x128xf32>
    %34 = arith.minimumf %32, %33 : vector<4x128xf32>
    %35 = vector.broadcast %4 : vector<1x128xf32> to vector<4x128xf32>
    %36 = vector.broadcast %17 : vector<4x1xf32> to vector<4x128xf32>
    %37 = arith.minimumf %35, %36 : vector<4x128xf32>
    %38 = arith.subf %34, %28 : vector<4x128xf32>
    %cst = arith.constant 0.000000e+00 : f32
    %39 = vector.broadcast %cst : f32 to vector<4x128xf32>
    %40 = arith.maximumf %38, %39 : vector<4x128xf32>
    %41 = arith.subf %37, %31 : vector<4x128xf32>
    %cst_4 = arith.constant 0.000000e+00 : f32
    %42 = vector.broadcast %cst_4 : f32 to vector<4x128xf32>
    %43 = arith.maximumf %41, %42 : vector<4x128xf32>
    %44 = arith.mulf %40, %43 : vector<4x128xf32>
    %45 = vector.broadcast %25 : vector<4x1xf32> to vector<4x128xf32>
    %46 = vector.broadcast %11 : vector<1x128xf32> to vector<4x128xf32>
    %47 = arith.addf %45, %46 : vector<4x128xf32>
    %48 = arith.subf %47, %44 : vector<4x128xf32>
    %49 = arith.divf %44, %48 : vector<4x128xf32>
    %50 = vector.broadcast %1 : vector<1x128xf32> to vector<4x128xf32>
    %51 = vector.broadcast %14 : vector<4x1xf32> to vector<4x128xf32>
    %52 = arith.minimumf %50, %51 : vector<4x128xf32>
    %53 = vector.broadcast %2 : vector<1x128xf32> to vector<4x128xf32>
    %54 = vector.broadcast %15 : vector<4x1xf32> to vector<4x128xf32>
    %55 = arith.minimumf %53, %54 : vector<4x128xf32>
    %56 = vector.broadcast %3 : vector<1x128xf32> to vector<4x128xf32>
    %57 = vector.broadcast %16 : vector<4x1xf32> to vector<4x128xf32>
    %58 = arith.maximumf %56, %57 : vector<4x128xf32>
    %59 = vector.broadcast %4 : vector<1x128xf32> to vector<4x128xf32>
    %60 = vector.broadcast %17 : vector<4x1xf32> to vector<4x128xf32>
    %61 = arith.maximumf %59, %60 : vector<4x128xf32>
    %62 = arith.subf %58, %52 : vector<4x128xf32>
    %cst_5 = arith.constant 0.000000e+00 : f32
    %63 = vector.broadcast %cst_5 : f32 to vector<4x128xf32>
    %64 = arith.maximumf %62, %63 : vector<4x128xf32>
    %65 = arith.subf %61, %55 : vector<4x128xf32>
    %cst_6 = arith.constant 0.000000e+00 : f32
    %66 = vector.broadcast %cst_6 : f32 to vector<4x128xf32>
    %67 = arith.maximumf %65, %66 : vector<4x128xf32>
    %68 = arith.mulf %64, %67 : vector<4x128xf32>
    %69 = arith.subf %68, %48 : vector<4x128xf32>
    %70 = arith.divf %69, %68 : vector<4x128xf32>
    %71 = arith.subf %49, %70 : vector<4x128xf32>
    %cst_7 = arith.constant -1.000000e+09 : f32
    %72 = vector.broadcast %cst_7 : f32 to vector<4x128xf32>
    %73 = arith.select %22, %71, %72 : vector<4x128xi1>, vector<4x128xf32>
    %cst_8 = arith.constant dense<0xFF800000> : vector<128xf32>
    %74 = vector.multi_reduction <maximumf>, %73, %cst_8 [0] : vector<4x128xf32> to vector<128xf32>
    %75 = vector.shape_cast %74 : vector<128xf32> to vector<1x128xf32>
    %76 = vector.broadcast %75 : vector<1x128xf32> to vector<4x128xf32>
    %77 = arith.cmpf oge, %73, %76 : vector<4x128xf32>
    %c4_i32 = arith.constant 4 : i32
    %78 = vector.broadcast %c4_i32 : i32 to vector<4x128xi32>
    %79 = arith.select %77, %20, %78 : vector<4x128xi1>, vector<4x128xi32>
    %cst_9 = arith.constant dense<2147483647> : vector<128xi32>
    %80 = vector.multi_reduction <minsi>, %79, %cst_9 [0] : vector<4x128xi32> to vector<128xi32>
    %81 = vector.shape_cast %80 : vector<128xi32> to vector<1x128xi32>
    %cst_10 = arith.constant dense<0xFF800000> : vector<4xf32>
    %82 = vector.multi_reduction <maximumf>, %73, %cst_10 [1] : vector<4x128xf32> to vector<4xf32>
    %83 = vector.shape_cast %82 : vector<4xf32> to vector<4x1xf32>
    %84 = vector.broadcast %83 : vector<4x1xf32> to vector<4x128xf32>
    %85 = arith.cmpf oge, %73, %84 : vector<4x128xf32>
    %c128_i32 = arith.constant 128 : i32
    %86 = vector.broadcast %c128_i32 : i32 to vector<4x128xi32>
    %87 = arith.select %85, %19, %86 : vector<4x128xi1>, vector<4x128xi32>
    %cst_11 = arith.constant dense<2147483647> : vector<4xi32>
    %88 = vector.multi_reduction <minsi>, %87, %cst_11 [1] : vector<4x128xi32> to vector<4xi32>
    %89 = vector.shape_cast %88 : vector<4xi32> to vector<4x1xi32>
    %90 = vector.broadcast %89 : vector<4x1xi32> to vector<4x128xi32>
    %91 = arith.cmpi eq, %19, %90 : vector<4x128xi32>
    %92 = arith.extui %91 : vector<4x128xi1> to vector<4x128xi32>
    %cst_12 = arith.constant dense<-2147483648> : vector<128xi32>
    %93 = vector.multi_reduction <maxsi>, %92, %cst_12 [0] : vector<4x128xi32> to vector<128xi32>
    %94 = vector.shape_cast %93 : vector<128xi32> to vector<1x128xi32>
    %c0_i32 = arith.constant 0 : i32
    %95 = vector.broadcast %c0_i32 : i32 to vector<1x128xi32>
    %96 = arith.cmpi sgt, %94, %95 : vector<1x128xi32>
    %c-1_i32 = arith.constant -1 : i32
    %97 = vector.broadcast %c-1_i32 : i32 to vector<4x128xi32>
    %98 = arith.select %91, %20, %97 : vector<4x128xi1>, vector<4x128xi32>
    %cst_13 = arith.constant dense<-2147483648> : vector<128xi32>
    %99 = vector.multi_reduction <maxsi>, %98, %cst_13 [0] : vector<4x128xi32> to vector<128xi32>
    %100 = vector.shape_cast %99 : vector<128xi32> to vector<1x128xi32>
    %cst_14 = arith.constant 1.000000e+00 : f32
    %cst_15 = arith.constant 0.000000e+00 : f32
    %101 = vector.broadcast %cst_14 : f32 to vector<1x128xf32>
    %102 = vector.broadcast %cst_15 : f32 to vector<1x128xf32>
    %103 = arith.select %96, %101, %102 : vector<1x128xi1>, vector<1x128xf32>
    %104 = arith.addf %75, %103 : vector<1x128xf32>
    %105 = arith.select %96, %100, %81 : vector<1x128xi1>, vector<1x128xi32>
    %106 = vector.broadcast %105 : vector<1x128xi32> to vector<4x128xi32>
    %107 = arith.cmpi eq, %20, %106 : vector<4x128xi32>
    %108 = arith.addf %14, %16 : vector<4x1xf32>
    %cst_16 = arith.constant 5.000000e-01 : f32
    %109 = vector.broadcast %cst_16 : f32 to vector<4x1xf32>
    %110 = arith.mulf %108, %109 : vector<4x1xf32>
    %cst_17 = arith.constant 0.000000e+00 : f32
    %111 = vector.shape_cast %110 : vector<4x1xf32> to vector<4x1xf32>
    %112 = vector.broadcast %111 : vector<4x1xf32> to vector<4x128xf32>
    %113 = vector.broadcast %cst_17 : f32 to vector<4x128xf32>
    %114 = arith.select %107, %112, %113 : vector<4x128xi1>, vector<4x128xf32>
    %cst_18 = arith.constant dense<0.000000e+00> : vector<128xf32>
    %115 = vector.multi_reduction <add>, %114, %cst_18 [0] : vector<4x128xf32> to vector<128xf32>
    %116 = vector.shape_cast %115 : vector<128xf32> to vector<1x128xf32>
    %117 = arith.addf %15, %17 : vector<4x1xf32>
    %cst_19 = arith.constant 5.000000e-01 : f32
    %118 = vector.broadcast %cst_19 : f32 to vector<4x1xf32>
    %119 = arith.mulf %117, %118 : vector<4x1xf32>
    %cst_20 = arith.constant 0.000000e+00 : f32
    %120 = vector.shape_cast %119 : vector<4x1xf32> to vector<4x1xf32>
    %121 = vector.broadcast %120 : vector<4x1xf32> to vector<4x128xf32>
    %122 = vector.broadcast %cst_20 : f32 to vector<4x128xf32>
    %123 = arith.select %107, %121, %122 : vector<4x128xi1>, vector<4x128xf32>
    %cst_21 = arith.constant dense<0.000000e+00> : vector<128xf32>
    %124 = vector.multi_reduction <add>, %123, %cst_21 [0] : vector<4x128xf32> to vector<128xf32>
    %125 = vector.shape_cast %124 : vector<128xf32> to vector<1x128xf32>
    %126 = arith.subf %16, %14 : vector<4x1xf32>
    %cst_22 = arith.constant 0.000000e+00 : f32
    %127 = vector.shape_cast %126 : vector<4x1xf32> to vector<4x1xf32>
    %128 = vector.broadcast %127 : vector<4x1xf32> to vector<4x128xf32>
    %129 = vector.broadcast %cst_22 : f32 to vector<4x128xf32>
    %130 = arith.select %107, %128, %129 : vector<4x128xi1>, vector<4x128xf32>
    %cst_23 = arith.constant dense<0.000000e+00> : vector<128xf32>
    %131 = vector.multi_reduction <add>, %130, %cst_23 [0] : vector<4x128xf32> to vector<128xf32>
    %132 = vector.shape_cast %131 : vector<128xf32> to vector<1x128xf32>
    %133 = arith.subf %17, %15 : vector<4x1xf32>
    %cst_24 = arith.constant 0.000000e+00 : f32
    %134 = vector.shape_cast %133 : vector<4x1xf32> to vector<4x1xf32>
    %135 = vector.broadcast %134 : vector<4x1xf32> to vector<4x128xf32>
    %136 = vector.broadcast %cst_24 : f32 to vector<4x128xf32>
    %137 = arith.select %107, %135, %136 : vector<4x128xi1>, vector<4x128xf32>
    %cst_25 = arith.constant dense<0.000000e+00> : vector<128xf32>
    %138 = vector.multi_reduction <add>, %137, %cst_25 [0] : vector<4x128xf32> to vector<128xf32>
    %139 = vector.shape_cast %138 : vector<128xf32> to vector<1x128xf32>
    %cst_26 = arith.constant 5.000000e-01 : f32
    %140 = vector.broadcast %cst_26 : f32 to vector<1x128xf32>
    %141 = arith.cmpf olt, %104, %140 : vector<1x128xf32>
    %cst_27 = arith.constant 0.000000e+00 : f32
    %142 = vector.shape_cast %18 : vector<4x1xf32> to vector<4x1xf32>
    %143 = vector.broadcast %142 : vector<4x1xf32> to vector<4x128xf32>
    %144 = vector.broadcast %cst_27 : f32 to vector<4x128xf32>
    %145 = arith.select %107, %143, %144 : vector<4x128xi1>, vector<4x128xf32>
    %cst_28 = arith.constant dense<0.000000e+00> : vector<128xf32>
    %146 = vector.multi_reduction <add>, %145, %cst_28 [0] : vector<4x128xf32> to vector<128xf32>
    %147 = vector.shape_cast %146 : vector<128xf32> to vector<1x128xf32>
    %cst_29 = arith.constant 0.000000e+00 : f32
    %148 = vector.broadcast %cst_29 : f32 to vector<1x128xf32>
    %149 = arith.select %141, %148, %147 : vector<1x128xi1>, vector<1x128xf32>
    %cst_30 = arith.constant 0.000000e+00 : f32
    %150 = vector.broadcast %cst_30 : f32 to vector<1x128xf32>
    %151 = arith.cmpf ogt, %149, %150 : vector<1x128xf32>
    %cst_31 = arith.constant 1.000000e+00 : f32
    %cst_32 = arith.constant 0.000000e+00 : f32
    %152 = vector.broadcast %cst_31 : f32 to vector<1x128xf32>
    %153 = vector.broadcast %cst_32 : f32 to vector<1x128xf32>
    %154 = arith.select %151, %152, %153 : vector<1x128xi1>, vector<1x128xf32>
    %155 = arith.subf %116, %5 : vector<1x128xf32>
    %156 = arith.mulf %155, %7 : vector<1x128xf32>
    %157 = arith.subf %125, %6 : vector<1x128xf32>
    %158 = arith.mulf %157, %8 : vector<1x128xf32>
    %cst_33 = arith.constant 1.000000e+00 : f32
    %159 = vector.broadcast %cst_33 : f32 to vector<1x128xf32>
    %160 = arith.mulf %7, %159 : vector<1x128xf32>
    %161 = arith.mulf %132, %160 : vector<1x128xf32>
    %162 = math.log %161 : vector<1x128xf32>
    %cst_34 = arith.constant 1.000000e+00 : f32
    %163 = vector.broadcast %cst_34 : f32 to vector<1x128xf32>
    %164 = arith.mulf %162, %163 : vector<1x128xf32>
    %cst_35 = arith.constant 1.000000e+00 : f32
    %165 = vector.broadcast %cst_35 : f32 to vector<1x128xf32>
    %166 = arith.mulf %8, %165 : vector<1x128xf32>
    %167 = arith.mulf %139, %166 : vector<1x128xf32>
    %168 = math.log %167 : vector<1x128xf32>
    %cst_36 = arith.constant 1.000000e+00 : f32
    %169 = vector.broadcast %cst_36 : f32 to vector<1x128xf32>
    %170 = arith.mulf %168, %169 : vector<1x128xf32>
    %c0_37 = arith.constant 0 : index
    %c0_38 = arith.constant 0 : index
    %c0_39 = arith.constant 0 : index
    %171 = vector.load %arg4[%c0_37, %c0_38, %c0_39] : memref<1x4x128xf32, #tpu.memory_space<vmem>>, vector<1x4x128xf32>
    %172 = vector.shape_cast %171 : vector<1x4x128xf32> to vector<4x128xf32>
    %173 = vector.extract_strided_slice %172 {offsets = [0, 0], sizes = [1, 128], strides = [1, 1]} : vector<4x128xf32> to vector<1x128xf32>
    %174 = arith.subf %173, %156 : vector<1x128xf32>
    %175 = math.absf %174 : vector<1x128xf32>
    %cst_40 = arith.constant 1.000000e+00 : f32
    %176 = vector.broadcast %cst_40 : f32 to vector<1x128xf32>
    %177 = arith.cmpf olt, %175, %176 : vector<1x128xf32>
    %cst_41 = arith.constant 5.000000e-01 : f32
    %178 = vector.broadcast %cst_41 : f32 to vector<1x128xf32>
    %179 = arith.mulf %178, %174 : vector<1x128xf32>
    %180 = arith.mulf %179, %174 : vector<1x128xf32>
    %cst_42 = arith.constant 5.000000e-01 : f32
    %181 = vector.broadcast %cst_42 : f32 to vector<1x128xf32>
    %182 = arith.subf %175, %181 : vector<1x128xf32>
    %183 = arith.select %177, %180, %182 : vector<1x128xi1>, vector<1x128xf32>
    %184 = vector.extract_strided_slice %172 {offsets = [1, 0], sizes = [1, 128], strides = [1, 1]} : vector<4x128xf32> to vector<1x128xf32>
    %185 = arith.subf %184, %158 : vector<1x128xf32>
    %186 = math.absf %185 : vector<1x128xf32>
    %cst_43 = arith.constant 1.000000e+00 : f32
    %187 = vector.broadcast %cst_43 : f32 to vector<1x128xf32>
    %188 = arith.cmpf olt, %186, %187 : vector<1x128xf32>
    %cst_44 = arith.constant 5.000000e-01 : f32
    %189 = vector.broadcast %cst_44 : f32 to vector<1x128xf32>
    %190 = arith.mulf %189, %185 : vector<1x128xf32>
    %191 = arith.mulf %190, %185 : vector<1x128xf32>
    %cst_45 = arith.constant 5.000000e-01 : f32
    %192 = vector.broadcast %cst_45 : f32 to vector<1x128xf32>
    %193 = arith.subf %186, %192 : vector<1x128xf32>
    %194 = arith.select %188, %191, %193 : vector<1x128xi1>, vector<1x128xf32>
    %195 = arith.addf %183, %194 : vector<1x128xf32>
    %196 = vector.extract_strided_slice %172 {offsets = [2, 0], sizes = [1, 128], strides = [1, 1]} : vector<4x128xf32> to vector<1x128xf32>
    %197 = arith.subf %196, %164 : vector<1x128xf32>
    %198 = math.absf %197 : vector<1x128xf32>
    %cst_46 = arith.constant 1.000000e+00 : f32
    %199 = vector.broadcast %cst_46 : f32 to vector<1x128xf32>
    %200 = arith.cmpf olt, %198, %199 : vector<1x128xf32>
    %cst_47 = arith.constant 5.000000e-01 : f32
    %201 = vector.broadcast %cst_47 : f32 to vector<1x128xf32>
    %202 = arith.mulf %201, %197 : vector<1x128xf32>
    %203 = arith.mulf %202, %197 : vector<1x128xf32>
    %cst_48 = arith.constant 5.000000e-01 : f32
    %204 = vector.broadcast %cst_48 : f32 to vector<1x128xf32>
    %205 = arith.subf %198, %204 : vector<1x128xf32>
    %206 = arith.select %200, %203, %205 : vector<1x128xi1>, vector<1x128xf32>
    %207 = arith.addf %195, %206 : vector<1x128xf32>
    %208 = vector.extract_strided_slice %172 {offsets = [3, 0], sizes = [1, 128], strides = [1, 1]} : vector<4x128xf32> to vector<1x128xf32>
    %209 = arith.subf %208, %170 : vector<1x128xf32>
    %210 = math.absf %209 : vector<1x128xf32>
    %cst_49 = arith.constant 1.000000e+00 : f32
    %211 = vector.broadcast %cst_49 : f32 to vector<1x128xf32>
    %212 = arith.cmpf olt, %210, %211 : vector<1x128xf32>
    %cst_50 = arith.constant 5.000000e-01 : f32
    %213 = vector.broadcast %cst_50 : f32 to vector<1x128xf32>
    %214 = arith.mulf %213, %209 : vector<1x128xf32>
    %215 = arith.mulf %214, %209 : vector<1x128xf32>
    %cst_51 = arith.constant 5.000000e-01 : f32
    %216 = vector.broadcast %cst_51 : f32 to vector<1x128xf32>
    %217 = arith.subf %210, %216 : vector<1x128xf32>
    %218 = arith.select %212, %215, %217 : vector<1x128xi1>, vector<1x128xf32>
    %219 = arith.addf %207, %218 : vector<1x128xf32>
    %c0_52 = arith.constant 0 : index
    %c0_53 = arith.constant 0 : index
    %c0_54 = arith.constant 0 : index
    %220 = vector.load %arg3[%c0_52, %c0_53, %c0_54] : memref<1x8x128xf32, #tpu.memory_space<vmem>>, vector<1x8x128xf32>
    %221 = vector.shape_cast %220 : vector<1x8x128xf32> to vector<8x128xf32>
    %cst_55 = arith.constant dense<0xFF800000> : vector<128xf32>
    %222 = vector.multi_reduction <maximumf>, %221, %cst_55 [0] : vector<8x128xf32> to vector<128xf32>
    %223 = vector.shape_cast %222 : vector<128xf32> to vector<1x128xf32>
    %224 = vector.broadcast %223 : vector<1x128xf32> to vector<8x128xf32>
    %225 = arith.subf %221, %224 : vector<8x128xf32>
    %226 = math.exp %225 : vector<8x128xf32>
    %cst_56 = arith.constant dense<0.000000e+00> : vector<128xf32>
    %227 = vector.multi_reduction <add>, %226, %cst_56 [0] : vector<8x128xf32> to vector<128xf32>
    %228 = vector.shape_cast %227 : vector<128xf32> to vector<1x128xf32>
    %229 = tpu.iota {dimensions = array<i32: 0>} : vector<8x128xi32>
    %230 = arith.sitofp %229 : vector<8x128xi32> to vector<8x128xf32>
    %231 = vector.broadcast %149 : vector<1x128xf32> to vector<8x128xf32>
    %232 = arith.cmpf oeq, %230, %231 : vector<8x128xf32>
    %cst_57 = arith.constant 0.000000e+00 : f32
    %233 = vector.broadcast %cst_57 : f32 to vector<8x128xf32>
    %234 = arith.select %232, %221, %233 : vector<8x128xi1>, vector<8x128xf32>
    %cst_58 = arith.constant dense<0.000000e+00> : vector<128xf32>
    %235 = vector.multi_reduction <add>, %234, %cst_58 [0] : vector<8x128xf32> to vector<128xf32>
    %236 = vector.shape_cast %235 : vector<128xf32> to vector<1x128xf32>
    %237 = math.log %228 : vector<1x128xf32>
    %238 = arith.addf %223, %237 : vector<1x128xf32>
    %239 = arith.subf %238, %236 : vector<1x128xf32>
    %cst_59 = arith.constant 0.000000e+00 : f32
    %240 = vector.broadcast %cst_59 : f32 to vector<1x128xf32>
    %241 = arith.cmpf ogt, %154, %240 : vector<1x128xf32>
    %cst_60 = arith.constant 0.000000e+00 : f32
    %242 = vector.broadcast %cst_60 : f32 to vector<1x128xf32>
    %243 = arith.select %241, %242, %239 : vector<1x128xi1>, vector<1x128xf32>
    %244 = vector.extract_strided_slice %19 {offsets = [0, 0], sizes = [1, 128], strides = [1, 1]} : vector<4x128xi32> to vector<1x128xi32>
    %c92_i32_61 = arith.constant 92 : i32
    %245 = vector.broadcast %c92_i32_61 : i32 to vector<1x128xi32>
    %246 = arith.cmpi slt, %244, %245 : vector<1x128xi32>
    %cst_62 = arith.constant -1.000000e+30 : f32
    %247 = vector.broadcast %cst_62 : f32 to vector<1x128xf32>
    %248 = arith.select %246, %243, %247 : vector<1x128xi1>, vector<1x128xf32>
    %249 = tpu.concatenate %154, %239, %219, %248 in 0 : vector<1x128xf32>, vector<1x128xf32>, vector<1x128xf32>, vector<1x128xf32> -> vector<4x128xf32>
    %c0_63 = arith.constant 0 : index
    %c0_64 = arith.constant 0 : index
    %c0_65 = arith.constant 0 : index
    %250 = vector.load %arg5[%c0_63, %c0_64, %c0_65] : memref<1x4x128xf32, #tpu.memory_space<vmem>>, vector<1x4x128xf32>
    %251 = vector.shape_cast %250 : vector<1x4x128xf32> to vector<4x128xf32>
    %252 = vector.shape_cast %249 : vector<4x128xf32> to vector<1x4x128xf32>
    tpu.vector_store %arg5[%c0_63, %c0_64, %c0_65], %252 {strides = array<i32>} : memref<1x4x128xf32, #tpu.memory_space<vmem>>, vector<1x4x128xf32>,
    return
  }
  func.func @transform_0(%arg0: i32) -> (i32, i32, i32) {
    %c0_i32 = arith.constant 0 : i32
    %c0_i32_0 = arith.constant 0 : i32
    %c0_i32_1 = arith.constant 0 : i32
    return %arg0, %c0_i32, %c0_i32_0 : i32, i32, i32
  }
  func.func @transform_1(%arg0: i32) -> (i32, i32) {
    %c0_i32 = arith.constant 0 : i32
    %c0_i32_0 = arith.constant 0 : i32
    %c0_i32_1 = arith.constant 0 : i32
    return %c0_i32, %c0_i32_0 : i32, i32
  }
  func.func @transform_2(%arg0: i32) -> (i32, i32, i32) {
    %c0_i32 = arith.constant 0 : i32
    %c0_i32_0 = arith.constant 0 : i32
    %c0_i32_1 = arith.constant 0 : i32
    return %arg0, %c0_i32, %c0_i32_0 : i32, i32, i32
  }
  func.func @transform_3(%arg0: i32) -> (i32, i32, i32) {
    %c0_i32 = arith.constant 0 : i32
    %c0_i32_0 = arith.constant 0 : i32
    %c0_i32_1 = arith.constant 0 : i32
    return %arg0, %c0_i32, %c0_i32_0 : i32, i32, i32
  }
  func.func @transform_4(%arg0: i32) -> (i32, i32, i32) {
    %c0_i32 = arith.constant 0 : i32
    %c0_i32_0 = arith.constant 0 : i32
    %c0_i32_1 = arith.constant 0 : i32
    return %arg0, %c0_i32, %c0_i32_0 : i32, i32, i32
  }
}

</mosaic_0001>

<llo_original>
// kernel: ssd_loss_pallas.2
$region0: #{ssd_loss_pallas.2}
  #allocation0 [shape = 'u32[]', space=smem, size = 0x4, offset = 0x4, fixed_abs, tag = 'smem constant byte address 0x4 - core index']
  #allocation1 [shape = 'u32[144,128]{1,0:T(1,128)}', space=vmem, size = 0x12000, scoped, tag = 'internal scratch']
  %s0 = inlined_call_operand.vmem [shape: f32[2,4,8], index: 0, kind: input, shape index: {}]
  %s1 = inlined_call_operand.vmem [shape: f32[8,128], index: 1, kind: input, shape index: {}]
  %s2 = inlined_call_operand.vmem [shape: f32[2,8,128], index: 2, kind: input, shape index: {}]
  %s3 = inlined_call_operand.vmem [shape: f32[2,4,128], index: 3, kind: input, shape index: {}]
  %s4 = inlined_call_operand.vmem [shape: f32[2,4,128], index: 4, kind: output, shape index: {}]
  %s5 = sld [smem:[#allocation0]]
  $region49: #{ssd_loss_pallas.2} parent=0
    _
  %s7 = ssub.s32 1, %s5
  %s8 = scalar_select 0, %s7, %s5
  loop: start=0, step=1, limit=4
  $region2: #{ssd_loss_pallas.2} parent=0 // loop_pre_header
    _
  $region3: #{ssd_loss_pallas.2} parent=0 // loop_header
    %s10 = sphi 0, %s14
    %p11 = scmp.ge.s32.totalorder %s10, 4
    %s20 = sphi 0, %s22
    %s23 = sphi 0, %s20
    %s24 = sphi 0, %s23
    %s40 = sphi 0, %s24
    %s44 = sphi 0, %s44
    %s46 = sphi 0, %s44
    %s47 = sphi 0, %s46
    %s61 = sphi 0, %s47
    %s67 = sphi 0, %s69
    %s70 = sphi 0, %s67
    %s71 = sphi 0, %s70
    %s87 = sphi 0, %s71
    %s93 = sphi 0, %s95
    %s96 = sphi 0, %s93
    %s97 = sphi 0, %s96
    %s113 = sphi 0, %s97
    %s119 = sphi 0, %s121
    %s122 = sphi 0, %s119
    %s123 = sphi 0, %s122
    %s139 = sphi 0, %s123
  $region4: #{ssd_loss_pallas.2} parent=0 // loop_header_branch
    %13 = sbr.rel (%p11) target = $region8
  $region5: #{ssd_loss_pallas.2} parent=0 // loop_body
    %s15 = ssub.s32 %s10, 1
    %s16 = ssub.s32 %s10, 2
    %s17 = sadd.s32 %s10, 1
    %s18 = ssub.s32 %s10, %s17
    %p19 = scmp.eq.s32.totalorder %s18, 0
    %s21 = sadd.s32 %s20, 1
    %s22 = scalar_select %p19, %s20, %s21
    %p25 = pneg %p19
    %p26 = scmp.eq.s32.totalorder %s10, 1
    %p27 = por %p25, %p26
    %p28 = scmp.ne.s32.totalorder %s20, %s23
    %p29 = scmp.eq.s32.totalorder %s10, 0
    %p30 = por %p28, %p29
    %p31 = scmp.ne.s32.totalorder %s20, %s23
    %p32 = scmp.eq.s32.totalorder %s15, 1
    %p33 = por %p31, %p32
    %p34 = scmp.ne.s32.totalorder %s23, %s24
    %p35 = scmp.eq.s32.totalorder %s15, 0
    %p36 = por %p34, %p35
    %p37 = scmp.ne.s32.totalorder %s23, %s24
    %p38 = scmp.eq.s32.totalorder %s16, 1
    %p39 = por %p37, %p38
    %p41 = scmp.ne.s32.totalorder %s24, %s40
    %p42 = scmp.eq.s32.totalorder %s16, 0
    %p43 = por %p41, %p42
    %s45 = sadd.s32 %s44, 1
    %p48 = scmp.eq.s32.totalorder %s10, 1
    %p49 = scmp.ne.s32.totalorder %s44, %s46
    %p50 = scmp.eq.s32.totalorder %s10, 0
    %p51 = por %p49, %p50
    %p52 = scmp.ne.s32.totalorder %s44, %s46
    %p53 = scmp.eq.s32.totalorder %s15, 1
    %p54 = por %p52, %p53
    %p55 = scmp.ne.s32.totalorder %s46, %s47
    %p56 = scmp.eq.s32.totalorder %s15, 0
    %p57 = por %p55, %p56
    %p58 = scmp.ne.s32.totalorder %s46, %s47
    %p59 = scmp.eq.s32.totalorder %s16, 1
    %p60 = por %p58, %p59
    %p62 = scmp.ne.s32.totalorder %s47, %s61
    %p63 = scmp.eq.s32.totalorder %s16, 0
    %p64 = por %p62, %p63
    %s65 = ssub.s32 %s10, %s17
    %p66 = scmp.eq.s32.totalorder %s65, 0
    %s68 = sadd.s32 %s67, 1
    %s69 = scalar_select %p66, %s67, %s68
    %p72 = pneg %p66
    %p73 = scmp.eq.s32.totalorder %s10, 1
    %p74 = por %p72, %p73
    %p75 = scmp.ne.s32.totalorder %s67, %s70
    %p76 = scmp.eq.s32.totalorder %s10, 0
    %p77 = por %p75, %p76
    %p78 = scmp.ne.s32.totalorder %s67, %s70
    %p79 = scmp.eq.s32.totalorder %s15, 1
    %p80 = por %p78, %p79
    %p81 = scmp.ne.s32.totalorder %s70, %s71
    %p82 = scmp.eq.s32.totalorder %s15, 0
    %p83 = por %p81, %p82
    %p84 = scmp.ne.s32.totalorder %s70, %s71
    %p85 = scmp.eq.s32.totalorder %s16, 1
    %p86 = por %p84, %p85
    %p88 = scmp.ne.s32.totalorder %s71, %s87
    %p89 = scmp.eq.s32.totalorder %s16, 0
    %p90 = por %p88, %p89
    %s91 = ssub.s32 %s10, %s17
    %p92 = scmp.eq.s32.totalorder %s91, 0
    %s94 = sadd.s32 %s93, 1
    %s95 = scalar_select %p92, %s93, %s94
    %p98 = pneg %p92
    %p99 = scmp.eq.s32.totalorder %s10, 1
    %p100 = por %p98, %p99
    %p101 = scmp.ne.s32.totalorder %s93, %s96
    %p102 = scmp.eq.s32.totalorder %s10, 0
    %p103 = por %p101, %p102
    %p104 = scmp.ne.s32.totalorder %s93, %s96
    %p105 = scmp.eq.s32.totalorder %s15, 1
    %p106 = por %p104, %p105
    %p107 = scmp.ne.s32.totalorder %s96, %s97
    %p108 = scmp.eq.s32.totalorder %s15, 0
    %p109 = por %p107, %p108
    %p110 = scmp.ne.s32.totalorder %s96, %s97
    %p111 = scmp.eq.s32.totalorder %s16, 1
    %p112 = por %p110, %p111
    %p114 = scmp.ne.s32.totalorder %s97, %s113
    %p115 = scmp.eq.s32.totalorder %s16, 0
    %p116 = por %p114, %p115
    %s117 = ssub.s32 %s10, %s17
    %p118 = scmp.eq.s32.totalorder %s117, 0
    %s120 = sadd.s32 %s119, 1
    %s121 = scalar_select %p118, %s119, %s120
    %p124 = pneg %p118
    %p125 = scmp.eq.s32.totalorder %s10, 1
    %p126 = por %p124, %p125
    %p127 = scmp.ne.s32.totalorder %s119, %s122
    %p128 = scmp.eq.s32.totalorder %s10, 0
    %p129 = por %p127, %p128
    %p130 = scmp.ne.s32.totalorder %s119, %s122
    %p131 = scmp.eq.s32.totalorder %s15, 1
    %p132 = por %p130, %p131
    %p133 = scmp.ne.s32.totalorder %s122, %s123
    %p134 = scmp.eq.s32.totalorder %s15, 0
    %p135 = por %p133, %p134
    %p136 = scmp.ne.s32.totalorder %s122, %s123
    %p137 = scmp.eq.s32.totalorder %s16, 1
    %p138 = por %p136, %p137
    %p140 = scmp.ne.s32.totalorder %s123, %s139
    %p141 = scmp.eq.s32.totalorder %s16, 0
    %p142 = por %p140, %p141
    %p143 = scmp.le.s32.totalorder 1, %s10
    %p144 = scmp.lt.s32.totalorder %s10, 3
    %p145 = pnand %p143, %p144
    %p146 = pneg %p145
    // Predicated region
    $region9: #{ssd_loss_pallas.2} parent=5 // pred_check
      _
    $region10: #{ssd_loss_pallas.2} parent=5 // pred_check_branch
      %148 = sbr.rel (%p145) target = $region12
    $region11: #{ssd_loss_pallas.2} parent=5 // pred_region
      %s149 = ssub.s32 %s10, 1
      // Predicated region
      $region13: #{ssd_loss_pallas.2} parent=11 // pred_check
        %p150 = pneg %p57
      $region14: #{ssd_loss_pallas.2} parent=11 // pred_check_branch
        %152 = sbr.rel (%p150) target = $region16
      $region15: #{ssd_loss_pallas.2} parent=11 // pred_region
        _
      $region16: #{ssd_loss_pallas.2} parent=11 // pred_fallthru
        _
    $region12: #{ssd_loss_pallas.2} parent=5 // pred_fallthru
      _
    %p153 = scmp.lt.s32.totalorder %s10, 2
    // Predicated region
    $region17: #{ssd_loss_pallas.2} parent=5 // pred_check
      %p154 = pneg %p153
    $region18: #{ssd_loss_pallas.2} parent=5 // pred_check_branch
      %156 = sbr.rel (%p154) target = $region20
    $region19: #{ssd_loss_pallas.2} parent=5 // pred_region
      // Predicated region
      $region21: #{ssd_loss_pallas.2} parent=19 // pred_check
        %p157 = pneg %p30
      $region22: #{ssd_loss_pallas.2} parent=19 // pred_check_branch
        %159 = sbr.rel (%p157) target = $region24
      $region23: #{ssd_loss_pallas.2} parent=19 // pred_region
        %p160 = scmp.lt.s32.totalorder %s10, 1
        %s161 = scalar_select %p160, %s10, 1
        %s162 = smul.addr %s161, 4
        %s163 = scalar_lea.vmem %s0, %s162
      $region24: #{ssd_loss_pallas.2} parent=19 // pred_fallthru
        _
      // Predicated region
      $region25: #{ssd_loss_pallas.2} parent=19 // pred_check
        %p164 = pneg %p77
      $region26: #{ssd_loss_pallas.2} parent=19 // pred_check_branch
        %166 = sbr.rel (%p164) target = $region28
      $region27: #{ssd_loss_pallas.2} parent=19 // pred_region
        %p167 = scmp.lt.s32.totalorder %s10, 1
        %s168 = scalar_select %p167, %s10, 1
        %s169 = smul.addr %s168, 8
        %s170 = scalar_lea.vmem %s2, %s169
      $region28: #{ssd_loss_pallas.2} parent=19 // pred_fallthru
        _
      // Predicated region
      $region29: #{ssd_loss_pallas.2} parent=19 // pred_check
        %p171 = pneg %p103
      $region30: #{ssd_loss_pallas.2} parent=19 // pred_check_branch
        %173 = sbr.rel (%p171) target = $region32
      $region31: #{ssd_loss_pallas.2} parent=19 // pred_region
        %p174 = scmp.lt.s32.totalorder %s10, 1
        %s175 = scalar_select %p174, %s10, 1
        %s176 = smul.addr %s175, 4
        %s177 = scalar_lea.vmem %s3, %s176
      $region32: #{ssd_loss_pallas.2} parent=19 // pred_fallthru
        _
    $region20: #{ssd_loss_pallas.2} parent=5 // pred_fallthru
      _
    %p178 = scmp.le.s32.totalorder 1, %s10
    %p179 = scmp.lt.s32.totalorder %s10, 3
    %p180 = pnand %p178, %p179
    %p181 = pneg %p180
    // Predicated region
    $region33: #{ssd_loss_pallas.2} parent=5 // pred_check
      _
    $region34: #{ssd_loss_pallas.2} parent=5 // pred_check_branch
      %183 = sbr.rel (%p180) target = $region36
    $region35: #{ssd_loss_pallas.2} parent=5 // pred_region
      %s184 = ssub.s32 %s10, 1
      %p185 = scmp.lt.s32.totalorder %s15, 1
      %s186 = scalar_select %p185, %s15, 1
      %s187 = smul.addr %s186, 4
      %s188 = scalar_lea.vmem %s0, %s187
      %p189 = pneg %p36
      %p190 = pneg %p33
      %p191 = pneg %p57
      %p192 = pneg %p54
      %p193 = scmp.lt.s32.totalorder %s15, 1
      %s194 = scalar_select %p193, %s15, 1
      %s195 = smul.addr %s194, 8
      %s196 = scalar_lea.vmem %s2, %s195
      %p197 = pneg %p83
      %p198 = pneg %p80
      %p199 = scmp.lt.s32.totalorder %s15, 1
      %s200 = scalar_select %p199, %s15, 1
      %s201 = smul.addr %s200, 4
      %s202 = scalar_lea.vmem %s3, %s201
      %p203 = pneg %p109
      %p204 = pneg %p106
      %p205 = pneg %p135
      %p206 = pneg %p132
      %p207 = scmp.lt.s32.totalorder %s15, 1
      %s208 = scalar_select %p207, %s15, 1
      %s209 = smul.addr %s208, 4
      %s210 = scalar_lea.vmem %s4, %s209
      %p211 = scmp.lt.s32.totalorder %s15, 1
      %s212 = scalar_select %p211, %s15, 1
      %s213 = smul.addr %s212, 4
      %s214 = scalar_lea.vmem %s0, %s213
      %p215 = scmp.lt.s32.totalorder %s15, 1
      %s216 = scalar_select %p215, %s15, 1
      %s217 = smul.addr %s216, 8
      %s218 = scalar_lea.vmem %s2, %s217
      %p219 = scmp.lt.s32.totalorder %s15, 1
      %s220 = scalar_select %p219, %s15, 1
      %s221 = smul.addr %s220, 4
      %s222 = scalar_lea.vmem %s3, %s221
      %p223 = scmp.lt.s32.totalorder %s15, 1
      %s224 = scalar_select %p223, %s15, 1
      %s225 = smul.addr %s224, 4
      %s226 = scalar_lea.vmem %s4, %s225
      %v227 = vld [vmem:[%s1] sm:$0xff]
      %v229 = vrot.slane %v227, 6
      %v231 = vsub.f32 %v227, %v229
      %v233 = vrot.slane %v231, 1
      %v235 = vmul.f32 %v231, %v233
      %v236 = vld [vmem:[%s214] sm:$0xf]
      %v237 = vlaneseq
      %v238 = vand.u32 %v237, 127
      %v239 = vlaneseq
      %v240 = vshrl.u32 %v239, 7
      %vm241 = vcmp.lt.s32.totalorder %v238, 92
      %243 = vrot.lane.b32.xlu0 %v236, 2
      %v244 = vpop.permute.xlu0 %243
      %v246 = vsub.f32 %v236, %v244
      %248 = vrot.lane.b32.xlu0 %v246, 127
      %v249 = vpop.permute.xlu0 %248
      %v251 = vmul.f32 %v246, %v249
      %v252 = vlaneseq
      %v253 = vshrl.u32 %v252, 7
      %v254 = vsub.s32 0, %v253
      %v255 = vrot.slane %v227, %v254
      %256 = vset.pattern.permute.xlu0 0
      %257 = vperm.xlu0 %256, %v236
      %v258 = vpop.permute.xlu0 %257
      %v260 = vmax.f32 %v255, %v258
      %v261 = vlaneseq
      %v262 = vshrl.u32 %v261, 7
      %v263 = vsub.s32 1, %v262
      %v264 = vrot.slane %v227, %v263
      %265 = vset.pattern.permute.xlu0 1
      %266 = vperm.xlu0 %265, %v236
      %v267 = vpop.permute.xlu0 %266
      %v269 = vmax.f32 %v264, %v267
      %v270 = vlaneseq
      %v271 = vshrl.u32 %v270, 7
      %v272 = vsub.s32 2, %v271
      %v273 = vrot.slane %v227, %v272
      %274 = vset.pattern.permute.xlu0 2
      %275 = vperm.xlu0 %274, %v236
      %v276 = vpop.permute.xlu0 %275
      %v278 = vmin.f32 %v273, %v276
      %v279 = vlaneseq
      %v280 = vshrl.u32 %v279, 7
      %v281 = vsub.s32 3, %v280
      %v282 = vrot.slane %v227, %v281
      %283 = vset.pattern.permute.xlu0 3
      %284 = vperm.xlu0 %283, %v236
      %v285 = vpop.permute.xlu0 %284
      %v287 = vmin.f32 %v282, %v285
      %v288 = vsub.f32 %v278, %v260
      %v289 = vmax.f32 %v288, 0.0
      %v290 = vsub.f32 %v287, %v269
      %v291 = vmax.f32 %v290, 0.0
      %v292 = vmul.f32 %v289, %v291
      %294 = vset.pattern.permute.xlu0 2
      %295 = vperm.xlu0 %294, %v251
      %v296 = vpop.permute.xlu0 %295
      %v298 = vlaneseq
      %v299 = vshrl.u32 %v298, 7
      %v300 = vsub.s32 2, %v299
      %v301 = vrot.slane %v235, %v300
      %v302 = vadd.f32 %v296, %v301
      %v303 = vsub.f32 %v302, %v292
      %v304 = vrcp.pop %v303
      %v305 = vmul.f32 %v292, %v304
      %v306 = vmin.f32 %v255, %v258
      %v307 = vmin.f32 %v264, %v267
      %v308 = vmax.f32 %v273, %v276
      %v309 = vmax.f32 %v282, %v285
      %v310 = vsub.f32 %v308, %v306
      %v311 = vmax.f32 %v310, 0.0
      %v312 = vsub.f32 %v309, %v307
      %v313 = vmax.f32 %v312, 0.0
      %v314 = vmul.f32 %v311, %v313
      %v315 = vsub.f32 %v314, %v303
      %v316 = vrcp.pop %v314
      %v317 = vmul.f32 %v315, %v316
      %v318 = vsub.f32 %v305, %v317
      %v319 = vsel %vm241, %v318, -1e+09
      %vm320 = vcmask 1043456
      %v321 = vsel %vm320, %v319, -inf
      %v322 = vrot.slane %v321, 4
      %v323 = vmax.f32 %v321, %v322
      %v324 = vrot.slane %v323, 2
      %v325 = vmax.f32 %v323, %v324
      %v326 = vrot.slane %v325, 1
      %v327 = vmax.f32 %v325, %v326
      %vm328 = vcmp.ge.f32.partialorder %v319, %v327
      %v329 = vsel %vm328, %v240, 4
      %v330 = vsel %vm320, %v329, 2147483647
      %v331 = vrot.slane %v330, 4
      %vm332 = vcmp.lt.s32.totalorder %v330, %v331
      %v333 = vsel %vm332, %v330, %v331
      %v334 = vrot.slane %v333, 2
      %vm335 = vcmp.lt.s32.totalorder %v333, %v334
      %v336 = vsel %vm335, %v333, %v334
      %v337 = vrot.slane %v336, 1
      %vm338 = vcmp.lt.s32.totalorder %v336, %v337
      %v339 = vsel %vm338, %v336, %v337
      %340 = vmax.xlane.f32.xlu0 %v321
      %v341 = vpop.xlane.xlu0 %340
      %vm342 = vcmp.ge.f32.partialorder %v319, %v341
      %v343 = vsel %vm342, %v238, 128
      %v344 = vsel %vm320, %v343, 2147483647
      %v345 = vand.u32 %v344, 65535
      %v346 = vshra.s32 %v344, 16
      %v347 = vcvt.s32.f32 %v345
      %v348 = vcvt.s32.f32 %v346
      %349 = vmin.xlane.f32.xlu0 %v348
      %v350 = vpop.xlane.xlu0 %349
      %vm351 = vcmp.eq.f32.partialorder %v348, %v350
      %v352 = vsel %vm351, %v347, inf
      %353 = vmin.xlane.f32.xlu0 %v352
      %v354 = vpop.xlane.xlu0 %353
      %v355 = vcvt.f32.s32 %v354
      %v356 = vcvt.f32.s32 %v350
      %v357 = vshll.u32 %v356, 16
      %v358 = vadd.s32 %v357, %v355
      %vm359 = vcmp.eq.s32.totalorder %v238, %v358
      %v360 = vsel %vm359, 1, 0
      %v361 = vsel %vm320, %v360, 2147483648
      %v362 = vrot.slane %v361, 4
      %vm363 = vcmp.gt.s32.totalorder %v361, %v362
      %v364 = vsel %vm363, %v361, %v362
      %v365 = vrot.slane %v364, 2
      %vm366 = vcmp.gt.s32.totalorder %v364, %v365
      %v367 = vsel %vm366, %v364, %v365
      %v368 = vrot.slane %v367, 1
      %vm369 = vcmp.gt.s32.totalorder %v367, %v368
      %v370 = vsel %vm369, %v367, %v368
      %vm371 = vcmp.gt.s32.totalorder %v370, 0
      %v372 = vsel %vm359, %v240, 4294967295
      %v373 = vsel %vm320, %v372, 2147483648
      %v374 = vrot.slane %v373, 4
      %vm375 = vcmp.gt.s32.totalorder %v373, %v374
      %v376 = vsel %vm375, %v373, %v374
      %v377 = vrot.slane %v376, 2
      %vm378 = vcmp.gt.s32.totalorder %v376, %v377
      %v379 = vsel %vm378, %v376, %v377
      %v380 = vrot.slane %v379, 1
      %vm381 = vcmp.gt.s32.totalorder %v379, %v380
      %v382 = vsel %vm381, %v379, %v380
      %v383 = vsel %vm371, 1.0, 0.0
      %v384 = vadd.f32 %v327, %v383
      %v385 = vsel %vm371, %v382, %v339
      %vm386 = vcmp.eq.s32.totalorder %v240, %v385
      %387 = vrot.lane.b32.xlu0 %v236, 126
      %v388 = vpop.permute.xlu0 %387
      %v390 = vadd.f32 %v236, %v388
      %v391 = vmul.f32 %v390, 0.5
      %393 = vset.pattern.permute.xlu0 0
      %394 = vperm.xlu0 %393, %v391
      %v395 = vpop.permute.xlu0 %394
      %v397 = vsel %vm386, %v395, 0.0
      %v398 = vsel %vm320, %v397, 0.0
      %v399 = vrot.slane %v398, 4
      %v400 = vadd.f32 %v398, %v399
      %v401 = vrot.slane %v400, 2
      %v402 = vadd.f32 %v400, %v401
      %v403 = vrot.slane %v402, 1
      %v404 = vadd.f32 %v402, %v403
      %405 = vset.pattern.permute.xlu0 1
      %406 = vperm.xlu0 %405, %v391
      %v407 = vpop.permute.xlu0 %406
      %v409 = vsel %vm386, %v407, 0.0
      %v410 = vsel %vm320, %v409, 0.0
      %v411 = vrot.slane %v410, 4
      %v412 = vadd.f32 %v410, %v411
      %v413 = vrot.slane %v412, 2
      %v414 = vadd.f32 %v412, %v413
      %v415 = vrot.slane %v414, 1
      %v416 = vadd.f32 %v414, %v415
      %417 = vset.pattern.permute.xlu0 2
      %418 = vperm.xlu0 %417, %v246
      %v419 = vpop.permute.xlu0 %418
      %v421 = vsel %vm386, %v419, 0.0
      %v422 = vsel %vm320, %v421, 0.0
      %v423 = vrot.slane %v422, 4
      %v424 = vadd.f32 %v422, %v423
      %v425 = vrot.slane %v424, 2
      %v426 = vadd.f32 %v424, %v425
      %v427 = vrot.slane %v426, 1
      %v428 = vadd.f32 %v426, %v427
      %429 = vset.pattern.permute.xlu0 3
      %430 = vperm.xlu0 %429, %v246
      %v431 = vpop.permute.xlu0 %430
      %v433 = vsel %vm386, %v431, 0.0
      %v434 = vsel %vm320, %v433, 0.0
      %v435 = vrot.slane %v434, 4
      %v436 = vadd.f32 %v434, %v435
      %v437 = vrot.slane %v436, 2
      %v438 = vadd.f32 %v436, %v437
      %v439 = vrot.slane %v438, 1
      %v440 = vadd.f32 %v438, %v439
      %vm441 = vcmp.lt.f32.partialorder %v384, 0.5
      %442 = vset.pattern.permute.xlu0 4
      %443 = vperm.xlu0 %442, %v236
      %v444 = vpop.permute.xlu0 %443
      %v446 = vsel %vm386, %v444, 0.0
      %v447 = vsel %vm320, %v446, 0.0
      %v448 = vrot.slane %v447, 4
      %v449 = vadd.f32 %v447, %v448
      %v450 = vrot.slane %v449, 2
      %v451 = vadd.f32 %v449, %v450
      %v452 = vrot.slane %v451, 1
      %v453 = vadd.f32 %v451, %v452
      %v454 = vsel %vm441, 0.0, %v453
      %vm455 = vcmp.gt.f32.partialorder %v454, 0.0
      %v456 = vsel %vm455, 1.0, 0.0
      %v457 = vsub.f32 %v404, %v227
      %v458 = vrot.slane %v227, 2
      %v460 = vmul.f32 %v457, %v458
      %v461 = vsub.f32 %v416, %v227
      %v462 = vmul.f32 %v461, %v458
      %v463 = vmul.f32 %v428, %v227
      %v464 = vlog2.pop %v463
      %v465 = vmul.f32 %v464, 0.6931472
      %v466 = vmul.f32 %v440, %v227
      %v467 = vlog2.pop %v466
      %v468 = vmul.f32 %v467, 0.6931472
      %v469 = vld [vmem:[%s222] sm:$0xf]
      %v471 = vrot.slane %v460, 4
      %v473 = vsub.f32 %v469, %v471
      %v474 = vand.u32 2147483647, %v473
      %vm475 = vcmp.lt.f32.partialorder %v474, 1.0
      %v476 = vmul.f32 %v473, 0.5
      %v477 = vmul.f32 %v476, %v473
      %v478 = vsub.f32 %v474, 0.5
      %v479 = vsel %vm475, %v477, %v478
      %v481 = vrot.slane %v462, 4
      %v483 = vsub.f32 %v469, %v481
      %v484 = vand.u32 2147483647, %v483
      %vm485 = vcmp.lt.f32.partialorder %v484, 1.0
      %v486 = vmul.f32 %v483, 0.5
      %v487 = vmul.f32 %v486, %v483
      %v488 = vsub.f32 %v484, 0.5
      %v489 = vsel %vm485, %v487, %v488
      %v491 = vrot.slane %v489, 1
      %v493 = vadd.f32 %v479, %v491
      %v495 = vrot.slane %v465, 4
      %v497 = vsub.f32 %v469, %v495
      %v498 = vand.u32 2147483647, %v497
      %vm499 = vcmp.lt.f32.partialorder %v498, 1.0
      %v500 = vmul.f32 %v497, 0.5
      %v501 = vmul.f32 %v500, %v497
      %v502 = vsub.f32 %v498, 0.5
      %v503 = vsel %vm499, %v501, %v502
      %v505 = vrot.slane %v503, 2
      %v507 = vadd.f32 %v493, %v505
      %v509 = vrot.slane %v468, 4
      %v511 = vsub.f32 %v469, %v509
      %v512 = vand.u32 2147483647, %v511
      %vm513 = vcmp.lt.f32.partialorder %v512, 1.0
      %v514 = vmul.f32 %v511, 0.5
      %v515 = vmul.f32 %v514, %v511
      %v516 = vsub.f32 %v512, 0.5
      %v517 = vsel %vm513, %v515, %v516
      %v519 = vrot.slane %v517, 3
      %v521 = vadd.f32 %v507, %v519
      %v522 = vld [vmem:[%s218] sm:$0xff]
      %v523 = vrot.slane %v522, 4
      %v524 = vmax.f32 %v522, %v523
      %v525 = vrot.slane %v524, 2
      %v526 = vmax.f32 %v524, %v525
      %v527 = vrot.slane %v526, 1
      %v528 = vmax.f32 %v526, %v527
      %v529 = vsub.f32 %v522, %v528
      %v530 = vmul.f32 %v529, 1.442695
      %v531 = vpow.pop %v530
      %v532 = vrot.slane %v531, 4
      %v533 = vadd.f32 %v531, %v532
      %v534 = vrot.slane %v533, 2
      %v535 = vadd.f32 %v533, %v534
      %v536 = vrot.slane %v535, 1
      %v537 = vadd.f32 %v535, %v536
      %v538 = vcvt.s32.f32 %v240
      %vm539 = vcmp.eq.f32.partialorder %v538, %v454
      %v540 = vsel %vm539, %v522, 0.0
      %v541 = vrot.slane %v540, 4
      %v542 = vadd.f32 %v540, %v541
      %v543 = vrot.slane %v542, 2
      %v544 = vadd.f32 %v542, %v543
      %v545 = vrot.slane %v544, 1
      %v546 = vadd.f32 %v544, %v545
      %v547 = vlog2.pop %v537
      %v548 = vmul.f32 %v547, 0.6931472
      %v549 = vadd.f32 %v528, %v548
      %v550 = vsub.f32 %v549, %v546
      %vm551 = vcmp.gt.f32.partialorder %v456, 0.0
      %v552 = vsel %vm551, 0.0, %v550
      %v553 = vsel %vm241, %v552, -1e+30
      %v555 = vrot.slane %v521, 6
      %vm557 = vcmask 1040384
      %v558 = vsel %vm557, %v456, %v550
      %vm559 = vcmask 1041408
      %v560 = vsel %vm559, %v558, %v555
      %vm561 = vcmask 1042432
      %v562 = vsel %vm561, %v560, %v553
      %563 = vst [vmem:[%s226] sm:$0xf] %v562
      %p564 = scmp.lt.s32.totalorder %s15, 1
      %s565 = scalar_select %p564, %s15, 1
      %s566 = smul.addr %s565, 4
      %s567 = scalar_lea.vmem %s4, %s566
      // Predicated region
      $region37: #{ssd_loss_pallas.2} parent=35 // pred_check
        %p568 = pneg %p132
      $region38: #{ssd_loss_pallas.2} parent=35 // pred_check_branch
        %570 = sbr.rel (%p568) target = $region40
      $region39: #{ssd_loss_pallas.2} parent=35 // pred_region
        _
      $region40: #{ssd_loss_pallas.2} parent=35 // pred_fallthru
        _
    $region36: #{ssd_loss_pallas.2} parent=5 // pred_fallthru
      _
    %p571 = scmp.le.s32.totalorder 2, %s10
    // Predicated region
    $region41: #{ssd_loss_pallas.2} parent=5 // pred_check
      %p572 = pneg %p571
    $region42: #{ssd_loss_pallas.2} parent=5 // pred_check_branch
      %574 = sbr.rel (%p572) target = $region44
    $region43: #{ssd_loss_pallas.2} parent=5 // pred_region
      %s575 = ssub.s32 %s10, 2
      // Predicated region
      $region45: #{ssd_loss_pallas.2} parent=43 // pred_check
        %p576 = pneg %p138
      $region46: #{ssd_loss_pallas.2} parent=43 // pred_check_branch
        %578 = sbr.rel (%p576) target = $region48
      $region47: #{ssd_loss_pallas.2} parent=43 // pred_region
        %p579 = scmp.lt.s32.totalorder %s16, 1
        %s580 = scalar_select %p579, %s16, 1
        %s581 = smul.addr %s580, 4
        %s582 = scalar_lea.vmem %s4, %s581
      $region48: #{ssd_loss_pallas.2} parent=43 // pred_fallthru
        _
    $region44: #{ssd_loss_pallas.2} parent=5 // pred_fallthru
      _
  $region6: #{ssd_loss_pallas.2} parent=0 // loop_footer
    %s14 = sadd.s32 1, %s10
  $region7: #{ssd_loss_pallas.2} parent=0 // loop_footer_branch
    %9 = sbr.rel target = $region3
  $region8: #{ssd_loss_pallas.2} parent=0 // loop_exit
    _

// kernel: ssd_loss_pallas.3
$region0: #{ssd_loss_pallas.3}
  #allocation0 [shape = 'u32[]', space=smem, size = 0x4, offset = 0x4, fixed_abs, tag = 'smem constant byte address 0x4 - core index']
  #allocation1 [shape = 'u32[144,128]{1,0:T(1,128)}', space=vmem, size = 0x12000, scoped, tag = 'internal scratch']
  %s0 = inlined_call_operand.vmem [shape: f32[2,4,128], index: 0, kind: input, shape index: {}]
  %s1 = inlined_call_operand.hbm [shape: f32[1,128], index: 1, kind: output, shape index: {}]
  %s2 = sld [smem:[#allocation0]]
  $region14: #{ssd_loss_pallas.3} parent=0
    _
  %s4 = ssub.s32 1, %s2
  %s5 = scalar_select 0, %s4, %s2
  $region1: #{ssd_loss_pallas.3} parent=0
    #allocation2 [shape = 'u8[512]{0}', space=vmem, size = 0x400, scoped, tag = 'output window, operand 0, single buffered']
    #allocation3 [shape = 's32[1]{0}', space=sflag, size = 0x4, scoped, tag = 'scoped memory for ssd_loss_pallas.3']
    %6 = vsyncpa [#allocation3], 0
    // Predicated region
    $region2: #{ssd_loss_pallas.3} parent=1 // pred_check
      _
    $region3: #{ssd_loss_pallas.3} parent=1 // pred_check_branch
      %8 = sbr.rel (0) target = $region5
    $region4: #{ssd_loss_pallas.3} parent=1 // pred_region
      _
    $region5: #{ssd_loss_pallas.3} parent=1 // pred_fallthru
      _
    %v9 = vld [vmem:[%s0] sm:$0xf]
    %vm10 = vcmask 1040384
    %v11 = vsel %vm10, %v9, 0.0
    %12 = vadd.xlane.f32.xlu0 %v11
    %v13 = vpop.xlane.xlu0 %12
    %v14 = vrot.slane %v13, 4
    %v15 = vadd.f32 %v13, %v14
    %v16 = vrot.slane %v15, 2
    %v17 = vadd.f32 %v15, %v16
    %v18 = vrot.slane %v17, 1
    %v19 = vadd.f32 %v17, %v18
    %s20 = vtos %v19
    %s21 = sadd.f32 %s20, 0.0
    %v23 = vrot.slane %v9, 6
    %v25 = vmul.f32 %v9, %v23
    %v27 = vrot.slane %v25, 2
    %v29 = vsel %vm10, %v27, 0.0
    %30 = vadd.xlane.f32.xlu0 %v29
    %v31 = vpop.xlane.xlu0 %30
    %v32 = vrot.slane %v31, 4
    %v33 = vadd.f32 %v31, %v32
    %v34 = vrot.slane %v33, 2
    %v35 = vadd.f32 %v33, %v34
    %v36 = vrot.slane %v35, 1
    %v37 = vadd.f32 %v35, %v36
    %s38 = vtos %v37
    %s39 = sadd.f32 %s38, 0.0
    %s40 = scalar_lea.vmem %s0, 4
    %v41 = vld [vmem:[%s40] sm:$0xf]
    %v42 = vsel %vm10, %v41, 0.0
    %43 = vadd.xlane.f32.xlu0 %v42
    %v44 = vpop.xlane.xlu0 %43
    %v45 = vrot.slane %v44, 4
    %v46 = vadd.f32 %v44, %v45
    %v47 = vrot.slane %v46, 2
    %v48 = vadd.f32 %v46, %v47
    %v49 = vrot.slane %v48, 1
    %v50 = vadd.f32 %v48, %v49
    %s51 = vtos %v50
    %s52 = sadd.f32 %s21, %s51
    %v54 = vrot.slane %v41, 6
    %v56 = vmul.f32 %v41, %v54
    %v58 = vrot.slane %v56, 2
    %v60 = vsel %vm10, %v58, 0.0
    %61 = vadd.xlane.f32.xlu0 %v60
    %v62 = vpop.xlane.xlu0 %61
    %v63 = vrot.slane %v62, 4
    %v64 = vadd.f32 %v62, %v63
    %v65 = vrot.slane %v64, 2
    %v66 = vadd.f32 %v64, %v65
    %v67 = vrot.slane %v66, 1
    %v68 = vadd.f32 %v66, %v67
    %s69 = vtos %v68
    %s70 = sadd.f32 %s39, %s69
    %s71 = smul.f32 %s52, 0.5
    %s72 = smin.f32 %s71, 183.0
    %v73 = vlaneseq
    %v74 = vshrl.u32 %v73, 7
    %v75 = vadd.s32 %v74, 8
    %v76 = vadd.s32 %v74, 16
    %v77 = vadd.s32 %v74, 24
    %v78 = vadd.s32 %v74, 32
    %v79 = vadd.s32 %v74, 40
    %v80 = vadd.s32 %v74, 48
    %v81 = vadd.s32 %v74, 56
    %v82 = vadd.s32 %v74, 64
    %v83 = vadd.s32 %v74, 72
    %v84 = vadd.s32 %v74, 80
    %v85 = vadd.s32 %v74, 88
    %v86 = vadd.s32 %v74, 96
    %v87 = vadd.s32 %v74, 104
    %v88 = vadd.s32 %v74, 112
    %v89 = vadd.s32 %v74, 120
    %v90 = vadd.s32 %v74, 128
    %v91 = vadd.s32 %v74, 136
    %v92 = vadd.s32 %v74, 144
    %v93 = vadd.s32 %v74, 152
    %v94 = vadd.s32 %v74, 160
    %v95 = vadd.s32 %v74, 168
    %v96 = vadd.s32 %v74, 176
    %v97 = vadd.s32 %v74, 184
    %v98 = vadd.s32 %v74, 192
    %v99 = vadd.s32 %v74, 200
    %v100 = vadd.s32 %v74, 208
    %v101 = vadd.s32 %v74, 216
    %v102 = vadd.s32 %v74, 224
    %v103 = vadd.s32 %v74, 232
    %v104 = vadd.s32 %v74, 240
    %v105 = vadd.s32 %v74, 248
    %v106 = vlaneseq
    %v107 = vand.u32 %v106, 127
    %v108 = vadd.s32 %v107, 128
    %vm109 = vcmp.eq.s32.totalorder %v74, %v107
    %vm110 = vcmp.eq.s32.totalorder %v74, %v108
    %vm111 = vcmp.eq.s32.totalorder %v75, %v107
    %vm112 = vcmp.eq.s32.totalorder %v75, %v108
    %vm113 = vcmp.eq.s32.totalorder %v76, %v107
    %vm114 = vcmp.eq.s32.totalorder %v76, %v108
    %vm115 = vcmp.eq.s32.totalorder %v77, %v107
    %vm116 = vcmp.eq.s32.totalorder %v77, %v108
    %vm117 = vcmp.eq.s32.totalorder %v78, %v107
    %vm118 = vcmp.eq.s32.totalorder %v78, %v108
    %vm119 = vcmp.eq.s32.totalorder %v79, %v107
    %vm120 = vcmp.eq.s32.totalorder %v79, %v108
    %vm121 = vcmp.eq.s32.totalorder %v80, %v107
    %vm122 = vcmp.eq.s32.totalorder %v80, %v108
    %vm123 = vcmp.eq.s32.totalorder %v81, %v107
    %vm124 = vcmp.eq.s32.totalorder %v81, %v108
    %vm125 = vcmp.eq.s32.totalorder %v82, %v107
    %vm126 = vcmp.eq.s32.totalorder %v82, %v108
    %vm127 = vcmp.eq.s32.totalorder %v83, %v107
    %vm128 = vcmp.eq.s32.totalorder %v83, %v108
    %vm129 = vcmp.eq.s32.totalorder %v84, %v107
    %vm130 = vcmp.eq.s32.totalorder %v84, %v108
    %vm131 = vcmp.eq.s32.totalorder %v85, %v107
    %vm132 = vcmp.eq.s32.totalorder %v85, %v108
    %vm133 = vcmp.eq.s32.totalorder %v86, %v107
    %vm134 = vcmp.eq.s32.totalorder %v86, %v108
    %vm135 = vcmp.eq.s32.totalorder %v87, %v107
    %vm136 = vcmp.eq.s32.totalorder %v87, %v108
    %vm137 = vcmp.eq.s32.totalorder %v88, %v107
    %vm138 = vcmp.eq.s32.totalorder %v88, %v108
    %vm139 = vcmp.eq.s32.totalorder %v89, %v107
    %vm140 = vcmp.eq.s32.totalorder %v89, %v108
    %vm141 = vcmp.eq.s32.totalorder %v90, %v107
    %vm142 = vcmp.eq.s32.totalorder %v90, %v108
    %vm143 = vcmp.eq.s32.totalorder %v91, %v107
    %vm144 = vcmp.eq.s32.totalorder %v91, %v108
    %vm145 = vcmp.eq.s32.totalorder %v92, %v107
    %vm146 = vcmp.eq.s32.totalorder %v92, %v108
    %vm147 = vcmp.eq.s32.totalorder %v93, %v107
    %vm148 = vcmp.eq.s32.totalorder %v93, %v108
    %vm149 = vcmp.eq.s32.totalorder %v94, %v107
    %vm150 = vcmp.eq.s32.totalorder %v94, %v108
    %vm151 = vcmp.eq.s32.totalorder %v95, %v107
    %vm152 = vcmp.eq.s32.totalorder %v95, %v108
    %vm153 = vcmp.eq.s32.totalorder %v96, %v107
    %vm154 = vcmp.eq.s32.totalorder %v96, %v108
    %vm155 = vcmp.eq.s32.totalorder %v97, %v107
    %vm156 = vcmp.eq.s32.totalorder %v97, %v108
    %vm157 = vcmp.eq.s32.totalorder %v98, %v107
    %vm158 = vcmp.eq.s32.totalorder %v98, %v108
    %vm159 = vcmp.eq.s32.totalorder %v99, %v107
    %vm160 = vcmp.eq.s32.totalorder %v99, %v108
    %vm161 = vcmp.eq.s32.totalorder %v100, %v107
    %vm162 = vcmp.eq.s32.totalorder %v100, %v108
    %vm163 = vcmp.eq.s32.totalorder %v101, %v107
    %vm164 = vcmp.eq.s32.totalorder %v101, %v108
    %vm165 = vcmp.eq.s32.totalorder %v102, %v107
    %vm166 = vcmp.eq.s32.totalorder %v102, %v108
    %vm167 = vcmp.eq.s32.totalorder %v103, %v107
    %vm168 = vcmp.eq.s32.totalorder %v103, %v108
    %vm169 = vcmp.eq.s32.totalorder %v104, %v107
    %vm170 = vcmp.eq.s32.totalorder %v104, %v108
    %vm171 = vcmp.eq.s32.totalorder %v105, %v107
    %vm172 = vcmp.eq.s32.totalorder %v105, %v108
    %v173 = vlaneseq
    %v174 = vshrl.u32 %v173, 7
    %v175 = vsub.s32 3, %v174
    %v176 = vrot.slane %v9, %v175
    %v177 = vlaneseq
    %v178 = vshrl.u32 %v177, 7
    %v179 = vsub.s32 3, %v178
    %v180 = vrot.slane %v41, %v179
    %v181 = vsel %vm109, %v176, 0.0
    %v182 = vsel %vm110, %v180, 0.0
    %v183 = vsel %vm111, %v176, 0.0
    %v184 = vsel %vm112, %v180, 0.0
    %v185 = vsel %vm113, %v176, 0.0
    %v186 = vsel %vm114, %v180, 0.0
    %v187 = vsel %vm115, %v176, 0.0
    %v188 = vsel %vm116, %v180, 0.0
    %v189 = vsel %vm117, %v176, 0.0
    %v190 = vsel %vm118, %v180, 0.0
    %v191 = vsel %vm119, %v176, 0.0
    %v192 = vsel %vm120, %v180, 0.0
    %v193 = vsel %vm121, %v176, 0.0
    %v194 = vsel %vm122, %v180, 0.0
    %v195 = vsel %vm123, %v176, 0.0
    %v196 = vsel %vm124, %v180, 0.0
    %v197 = vsel %vm125, %v176, 0.0
    %v198 = vsel %vm126, %v180, 0.0
    %v199 = vsel %vm127, %v176, 0.0
    %v200 = vsel %vm128, %v180, 0.0
    %v201 = vsel %vm129, %v176, 0.0
    %v202 = vsel %vm130, %v180, 0.0
    %v203 = vsel %vm131, %v176, 0.0
    %v204 = vsel %vm132, %v180, 0.0
    %v205 = vsel %vm133, %v176, 0.0
    %v206 = vsel %vm134, %v180, 0.0
    %v207 = vsel %vm135, %v176, 0.0
    %v208 = vsel %vm136, %v180, 0.0
    %v209 = vsel %vm137, %v176, 0.0
    %v210 = vsel %vm138, %v180, 0.0
    %v211 = vsel %vm139, %v176, 0.0
    %v212 = vsel %vm140, %v180, 0.0
    %v213 = vsel %vm141, %v176, 0.0
    %v214 = vsel %vm142, %v180, 0.0
    %v215 = vsel %vm143, %v176, 0.0
    %v216 = vsel %vm144, %v180, 0.0
    %v217 = vsel %vm145, %v176, 0.0
    %v218 = vsel %vm146, %v180, 0.0
    %v219 = vsel %vm147, %v176, 0.0
    %v220 = vsel %vm148, %v180, 0.0
    %v221 = vsel %vm149, %v176, 0.0
    %v222 = vsel %vm150, %v180, 0.0
    %v223 = vsel %vm151, %v176, 0.0
    %v224 = vsel %vm152, %v180, 0.0
    %v225 = vsel %vm153, %v176, 0.0
    %v226 = vsel %vm154, %v180, 0.0
    %v227 = vsel %vm155, %v176, 0.0
    %v228 = vsel %vm156, %v180, 0.0
    %v229 = vsel %vm157, %v176, 0.0
    %v230 = vsel %vm158, %v180, 0.0
    %v231 = vsel %vm159, %v176, 0.0
    %v232 = vsel %vm160, %v180, 0.0
    %v233 = vsel %vm161, %v176, 0.0
    %v234 = vsel %vm162, %v180, 0.0
    %v235 = vsel %vm163, %v176, 0.0
    %v236 = vsel %vm164, %v180, 0.0
    %v237 = vsel %vm165, %v176, 0.0
    %v238 = vsel %vm166, %v180, 0.0
    %v239 = vsel %vm167, %v176, 0.0
    %v240 = vsel %vm168, %v180, 0.0
    %v241 = vsel %vm169, %v176, 0.0
    %v242 = vsel %vm170, %v180, 0.0
    %v243 = vsel %vm171, %v176, 0.0
    %v244 = vsel %vm172, %v180, 0.0
    %v245 = vadd.f32 %v181, %v182
    %246 = vadd.xlane.f32.xlu0 %v245
    %v247 = vpop.xlane.xlu0 %246
    %v248 = vadd.f32 %v183, %v184
    %249 = vadd.xlane.f32.xlu0 %v248
    %v250 = vpop.xlane.xlu0 %249
    %v251 = vadd.f32 %v185, %v186
    %252 = vadd.xlane.f32.xlu0 %v251
    %v253 = vpop.xlane.xlu0 %252
    %v254 = vadd.f32 %v187, %v188
    %255 = vadd.xlane.f32.xlu0 %v254
    %v256 = vpop.xlane.xlu0 %255
    %v257 = vadd.f32 %v189, %v190
    %258 = vadd.xlane.f32.xlu0 %v257
    %v259 = vpop.xlane.xlu0 %258
    %v260 = vadd.f32 %v191, %v192
    %261 = vadd.xlane.f32.xlu0 %v260
    %v262 = vpop.xlane.xlu0 %261
    %v263 = vadd.f32 %v193, %v194
    %264 = vadd.xlane.f32.xlu0 %v263
    %v265 = vpop.xlane.xlu0 %264
    %v266 = vadd.f32 %v195, %v196
    %267 = vadd.xlane.f32.xlu0 %v266
    %v268 = vpop.xlane.xlu0 %267
    %v269 = vadd.f32 %v197, %v198
    %270 = vadd.xlane.f32.xlu0 %v269
    %v271 = vpop.xlane.xlu0 %270
    %v272 = vadd.f32 %v199, %v200
    %273 = vadd.xlane.f32.xlu0 %v272
    %v274 = vpop.xlane.xlu0 %273
    %v275 = vadd.f32 %v201, %v202
    %276 = vadd.xlane.f32.xlu0 %v275
    %v277 = vpop.xlane.xlu0 %276
    %v278 = vadd.f32 %v203, %v204
    %279 = vadd.xlane.f32.xlu0 %v278
    %v280 = vpop.xlane.xlu0 %279
    %v281 = vadd.f32 %v205, %v206
    %282 = vadd.xlane.f32.xlu0 %v281
    %v283 = vpop.xlane.xlu0 %282
    %v284 = vadd.f32 %v207, %v208
    %285 = vadd.xlane.f32.xlu0 %v284
    %v286 = vpop.xlane.xlu0 %285
    %v287 = vadd.f32 %v209, %v210
    %288 = vadd.xlane.f32.xlu0 %v287
    %v289 = vpop.xlane.xlu0 %288
    %v290 = vadd.f32 %v211, %v212
    %291 = vadd.xlane.f32.xlu0 %v290
    %v292 = vpop.xlane.xlu0 %291
    %v293 = vadd.f32 %v213, %v214
    %294 = vadd.xlane.f32.xlu0 %v293
    %v295 = vpop.xlane.xlu0 %294
    %v296 = vadd.f32 %v215, %v216
    %297 = vadd.xlane.f32.xlu0 %v296
    %v298 = vpop.xlane.xlu0 %297
    %v299 = vadd.f32 %v217, %v218
    %300 = vadd.xlane.f32.xlu0 %v299
    %v301 = vpop.xlane.xlu0 %300
    %v302 = vadd.f32 %v219, %v220
    %303 = vadd.xlane.f32.xlu0 %v302
    %v304 = vpop.xlane.xlu0 %303
    %v305 = vadd.f32 %v221, %v222
    %306 = vadd.xlane.f32.xlu0 %v305
    %v307 = vpop.xlane.xlu0 %306
    %v308 = vadd.f32 %v223, %v224
    %309 = vadd.xlane.f32.xlu0 %v308
    %v310 = vpop.xlane.xlu0 %309
    %v311 = vadd.f32 %v225, %v226
    %312 = vadd.xlane.f32.xlu0 %v311
    %v313 = vpop.xlane.xlu0 %312
    %v314 = vadd.f32 %v227, %v228
    %315 = vadd.xlane.f32.xlu0 %v314
    %v316 = vpop.xlane.xlu0 %315
    %v317 = vadd.f32 %v229, %v230
    %318 = vadd.xlane.f32.xlu0 %v317
    %v319 = vpop.xlane.xlu0 %318
    %v320 = vadd.f32 %v231, %v232
    %321 = vadd.xlane.f32.xlu0 %v320
    %v322 = vpop.xlane.xlu0 %321
    %v323 = vadd.f32 %v233, %v234
    %324 = vadd.xlane.f32.xlu0 %v323
    %v325 = vpop.xlane.xlu0 %324
    %v326 = vadd.f32 %v235, %v236
    %327 = vadd.xlane.f32.xlu0 %v326
    %v328 = vpop.xlane.xlu0 %327
    %v329 = vadd.f32 %v237, %v238
    %330 = vadd.xlane.f32.xlu0 %v329
    %v331 = vpop.xlane.xlu0 %330
    %v332 = vadd.f32 %v239, %v240
    %333 = vadd.xlane.f32.xlu0 %v332
    %v334 = vpop.xlane.xlu0 %333
    %v335 = vadd.f32 %v241, %v242
    %336 = vadd.xlane.f32.xlu0 %v335
    %v337 = vpop.xlane.xlu0 %336
    %v338 = vadd.f32 %v243, %v244
    %339 = vadd.xlane.f32.xlu0 %v338
    %v340 = vpop.xlane.xlu0 %339
    %vm341 = vcmp.gt.f32.partialorder %v176, %v247
    %vm342 = vcmp.gt.f32.partialorder %v180, %v247
    %vm343 = vcmp.gt.f32.partialorder %v176, %v250
    %vm344 = vcmp.gt.f32.partialorder %v180, %v250
    %vm345 = vcmp.gt.f32.partialorder %v176, %v253
    %vm346 = vcmp.gt.f32.partialorder %v180, %v253
    %vm347 = vcmp.gt.f32.partialorder %v176, %v256
    %vm348 = vcmp.gt.f32.partialorder %v180, %v256
    %vm349 = vcmp.gt.f32.partialorder %v176, %v259
    %vm350 = vcmp.gt.f32.partialorder %v180, %v259
    %vm351 = vcmp.gt.f32.partialorder %v176, %v262
    %vm352 = vcmp.gt.f32.partialorder %v180, %v262
    %vm353 = vcmp.gt.f32.partialorder %v176, %v265
    %vm354 = vcmp.gt.f32.partialorder %v180, %v265
    %vm355 = vcmp.gt.f32.partialorder %v176, %v268
    %vm356 = vcmp.gt.f32.partialorder %v180, %v268
    %vm357 = vcmp.gt.f32.partialorder %v176, %v271
    %vm358 = vcmp.gt.f32.partialorder %v180, %v271
    %vm359 = vcmp.gt.f32.partialorder %v176, %v274
    %vm360 = vcmp.gt.f32.partialorder %v180, %v274
    %vm361 = vcmp.gt.f32.partialorder %v176, %v277
    %vm362 = vcmp.gt.f32.partialorder %v180, %v277
    %vm363 = vcmp.gt.f32.partialorder %v176, %v280
    %vm364 = vcmp.gt.f32.partialorder %v180, %v280
    %vm365 = vcmp.gt.f32.partialorder %v176, %v283
    %vm366 = vcmp.gt.f32.partialorder %v180, %v283
    %vm367 = vcmp.gt.f32.partialorder %v176, %v286
    %vm368 = vcmp.gt.f32.partialorder %v180, %v286
    %vm369 = vcmp.gt.f32.partialorder %v176, %v289
    %vm370 = vcmp.gt.f32.partialorder %v180, %v289
    %vm371 = vcmp.gt.f32.partialorder %v176, %v292
    %vm372 = vcmp.gt.f32.partialorder %v180, %v292
    %vm373 = vcmp.gt.f32.partialorder %v176, %v295
    %vm374 = vcmp.gt.f32.partialorder %v180, %v295
    %vm375 = vcmp.gt.f32.partialorder %v176, %v298
    %vm376 = vcmp.gt.f32.partialorder %v180, %v298
    %vm377 = vcmp.gt.f32.partialorder %v176, %v301
    %vm378 = vcmp.gt.f32.partialorder %v180, %v301
    %vm379 = vcmp.gt.f32.partialorder %v176, %v304
    %vm380 = vcmp.gt.f32.partialorder %v180, %v304
    %vm381 = vcmp.gt.f32.partialorder %v176, %v307
    %vm382 = vcmp.gt.f32.partialorder %v180, %v307
    %vm383 = vcmp.gt.f32.partialorder %v176, %v310
    %vm384 = vcmp.gt.f32.partialorder %v180, %v310
    %vm385 = vcmp.gt.f32.partialorder %v176, %v313
    %vm386 = vcmp.gt.f32.partialorder %v180, %v313
    %vm387 = vcmp.gt.f32.partialorder %v176, %v316
    %vm388 = vcmp.gt.f32.partialorder %v180, %v316
    %vm389 = vcmp.gt.f32.partialorder %v176, %v319
    %vm390 = vcmp.gt.f32.partialorder %v180, %v319
    %vm391 = vcmp.gt.f32.partialorder %v176, %v322
    %vm392 = vcmp.gt.f32.partialorder %v180, %v322
    %vm393 = vcmp.gt.f32.partialorder %v176, %v325
    %vm394 = vcmp.gt.f32.partialorder %v180, %v325
    %vm395 = vcmp.gt.f32.partialorder %v176, %v328
    %vm396 = vcmp.gt.f32.partialorder %v180, %v328
    %vm397 = vcmp.gt.f32.partialorder %v176, %v331
    %vm398 = vcmp.gt.f32.partialorder %v180, %v331
    %vm399 = vcmp.gt.f32.partialorder %v176, %v334
    %vm400 = vcmp.gt.f32.partialorder %v180, %v334
    %vm401 = vcmp.gt.f32.partialorder %v176, %v337
    %vm402 = vcmp.gt.f32.partialorder %v180, %v337
    %vm403 = vcmp.gt.f32.partialorder %v176, %v340
    %vm404 = vcmp.gt.f32.partialorder %v180, %v340
    %v405 = vsel %vm341, 1, 0
    %v406 = vsel %vm342, 1, 0
    %v407 = vsel %vm343, 1, 0
    %v408 = vsel %vm344, 1, 0
    %v409 = vsel %vm345, 1, 0
    %v410 = vsel %vm346, 1, 0
    %v411 = vsel %vm347, 1, 0
    %v412 = vsel %vm348, 1, 0
    %v413 = vsel %vm349, 1, 0
    %v414 = vsel %vm350, 1, 0
    %v415 = vsel %vm351, 1, 0
    %v416 = vsel %vm352, 1, 0
    %v417 = vsel %vm353, 1, 0
    %v418 = vsel %vm354, 1, 0
    %v419 = vsel %vm355, 1, 0
    %v420 = vsel %vm356, 1, 0
    %v421 = vsel %vm357, 1, 0
    %v422 = vsel %vm358, 1, 0
    %v423 = vsel %vm359, 1, 0
    %v424 = vsel %vm360, 1, 0
    %v425 = vsel %vm361, 1, 0
    %v426 = vsel %vm362, 1, 0
    %v427 = vsel %vm363, 1, 0
    %v428 = vsel %vm364, 1, 0
    %v429 = vsel %vm365, 1, 0
    %v430 = vsel %vm366, 1, 0
    %v431 = vsel %vm367, 1, 0
    %v432 = vsel %vm368, 1, 0
    %v433 = vsel %vm369, 1, 0
    %v434 = vsel %vm370, 1, 0
    %v435 = vsel %vm371, 1, 0
    %v436 = vsel %vm372, 1, 0
    %v437 = vsel %vm373, 1, 0
    %v438 = vsel %vm374, 1, 0
    %v439 = vsel %vm375, 1, 0
    %v440 = vsel %vm376, 1, 0
    %v441 = vsel %vm377, 1, 0
    %v442 = vsel %vm378, 1, 0
    %v443 = vsel %vm379, 1, 0
    %v444 = vsel %vm380, 1, 0
    %v445 = vsel %vm381, 1, 0
    %v446 = vsel %vm382, 1, 0
    %v447 = vsel %vm383, 1, 0
    %v448 = vsel %vm384, 1, 0
    %v449 = vsel %vm385, 1, 0
    %v450 = vsel %vm386, 1, 0
    %v451 = vsel %vm387, 1, 0
    %v452 = vsel %vm388, 1, 0
    %v453 = vsel %vm389, 1, 0
    %v454 = vsel %vm390, 1, 0
    %v455 = vsel %vm391, 1, 0
    %v456 = vsel %vm392, 1, 0
    %v457 = vsel %vm393, 1, 0
    %v458 = vsel %vm394, 1, 0
    %v459 = vsel %vm395, 1, 0
    %v460 = vsel %vm396, 1, 0
    %v461 = vsel %vm397, 1, 0
    %v462 = vsel %vm398, 1, 0
    %v463 = vsel %vm399, 1, 0
    %v464 = vsel %vm400, 1, 0
    %v465 = vsel %vm401, 1, 0
    %v466 = vsel %vm402, 1, 0
    %v467 = vsel %vm403, 1, 0
    %v468 = vsel %vm404, 1, 0
    %v469 = vcvt.s32.f32 %v405
    %v470 = vcvt.s32.f32 %v406
    %v471 = vcvt.s32.f32 %v407
    %v472 = vcvt.s32.f32 %v408
    %v473 = vcvt.s32.f32 %v409
    %v474 = vcvt.s32.f32 %v410
    %v475 = vcvt.s32.f32 %v411
    %v476 = vcvt.s32.f32 %v412
    %v477 = vcvt.s32.f32 %v413
    %v478 = vcvt.s32.f32 %v414
    %v479 = vcvt.s32.f32 %v415
    %v480 = vcvt.s32.f32 %v416
    %v481 = vcvt.s32.f32 %v417
    %v482 = vcvt.s32.f32 %v418
    %v483 = vcvt.s32.f32 %v419
    %v484 = vcvt.s32.f32 %v420
    %v485 = vcvt.s32.f32 %v421
    %v486 = vcvt.s32.f32 %v422
    %v487 = vcvt.s32.f32 %v423
    %v488 = vcvt.s32.f32 %v424
    %v489 = vcvt.s32.f32 %v425
    %v490 = vcvt.s32.f32 %v426
    %v491 = vcvt.s32.f32 %v427
    %v492 = vcvt.s32.f32 %v428
    %v493 = vcvt.s32.f32 %v429
    %v494 = vcvt.s32.f32 %v430
    %v495 = vcvt.s32.f32 %v431
    %v496 = vcvt.s32.f32 %v432
    %v497 = vcvt.s32.f32 %v433
    %v498 = vcvt.s32.f32 %v434
    %v499 = vcvt.s32.f32 %v435
    %v500 = vcvt.s32.f32 %v436
    %v501 = vcvt.s32.f32 %v437
    %v502 = vcvt.s32.f32 %v438
    %v503 = vcvt.s32.f32 %v439
    %v504 = vcvt.s32.f32 %v440
    %v505 = vcvt.s32.f32 %v441
    %v506 = vcvt.s32.f32 %v442
    %v507 = vcvt.s32.f32 %v443
    %v508 = vcvt.s32.f32 %v444
    %v509 = vcvt.s32.f32 %v445
    %v510 = vcvt.s32.f32 %v446
    %v511 = vcvt.s32.f32 %v447
    %v512 = vcvt.s32.f32 %v448
    %v513 = vcvt.s32.f32 %v449
    %v514 = vcvt.s32.f32 %v450
    %v515 = vcvt.s32.f32 %v451
    %v516 = vcvt.s32.f32 %v452
    %v517 = vcvt.s32.f32 %v453
    %v518 = vcvt.s32.f32 %v454
    %v519 = vcvt.s32.f32 %v455
    %v520 = vcvt.s32.f32 %v456
    %v521 = vcvt.s32.f32 %v457
    %v522 = vcvt.s32.f32 %v458
    %v523 = vcvt.s32.f32 %v459
    %v524 = vcvt.s32.f32 %v460
    %v525 = vcvt.s32.f32 %v461
    %v526 = vcvt.s32.f32 %v462
    %v527 = vcvt.s32.f32 %v463
    %v528 = vcvt.s32.f32 %v464
    %v529 = vcvt.s32.f32 %v465
    %v530 = vcvt.s32.f32 %v466
    %v531 = vcvt.s32.f32 %v467
    %v532 = vcvt.s32.f32 %v468
    %v533 = vadd.f32 %v469, %v470
    %534 = vadd.xlane.f32.xlu0 %v533
    %v535 = vpop.xlane.xlu0 %534
    %v536 = vadd.f32 %v471, %v472
    %537 = vadd.xlane.f32.xlu0 %v536
    %v538 = vpop.xlane.xlu0 %537
    %v539 = vadd.f32 %v473, %v474
    %540 = vadd.xlane.f32.xlu0 %v539
    %v541 = vpop.xlane.xlu0 %540
    %v542 = vadd.f32 %v475, %v476
    %543 = vadd.xlane.f32.xlu0 %v542
    %v544 = vpop.xlane.xlu0 %543
    %v545 = vadd.f32 %v477, %v478
    %546 = vadd.xlane.f32.xlu0 %v545
    %v547 = vpop.xlane.xlu0 %546
    %v548 = vadd.f32 %v479, %v480
    %549 = vadd.xlane.f32.xlu0 %v548
    %v550 = vpop.xlane.xlu0 %549
    %v551 = vadd.f32 %v481, %v482
    %552 = vadd.xlane.f32.xlu0 %v551
    %v553 = vpop.xlane.xlu0 %552
    %v554 = vadd.f32 %v483, %v484
    %555 = vadd.xlane.f32.xlu0 %v554
    %v556 = vpop.xlane.xlu0 %555
    %v557 = vadd.f32 %v485, %v486
    %558 = vadd.xlane.f32.xlu0 %v557
    %v559 = vpop.xlane.xlu0 %558
    %v560 = vadd.f32 %v487, %v488
    %561 = vadd.xlane.f32.xlu0 %v560
    %v562 = vpop.xlane.xlu0 %561
    %v563 = vadd.f32 %v489, %v490
    %564 = vadd.xlane.f32.xlu0 %v563
    %v565 = vpop.xlane.xlu0 %564
    %v566 = vadd.f32 %v491, %v492
    %567 = vadd.xlane.f32.xlu0 %v566
    %v568 = vpop.xlane.xlu0 %567
    %v569 = vadd.f32 %v493, %v494
    %570 = vadd.xlane.f32.xlu0 %v569
    %v571 = vpop.xlane.xlu0 %570
    %v572 = vadd.f32 %v495, %v496
    %573 = vadd.xlane.f32.xlu0 %v572
    %v574 = vpop.xlane.xlu0 %573
    %v575 = vadd.f32 %v497, %v498
    %576 = vadd.xlane.f32.xlu0 %v575
    %v577 = vpop.xlane.xlu0 %576
    %v578 = vadd.f32 %v499, %v500
    %579 = vadd.xlane.f32.xlu0 %v578
    %v580 = vpop.xlane.xlu0 %579
    %v581 = vadd.f32 %v501, %v502
    %582 = vadd.xlane.f32.xlu0 %v581
    %v583 = vpop.xlane.xlu0 %582
    %v584 = vadd.f32 %v503, %v504
    %585 = vadd.xlane.f32.xlu0 %v584
    %v586 = vpop.xlane.xlu0 %585
    %v587 = vadd.f32 %v505, %v506
    %588 = vadd.xlane.f32.xlu0 %v587
    %v589 = vpop.xlane.xlu0 %588
    %v590 = vadd.f32 %v507, %v508
    %591 = vadd.xlane.f32.xlu0 %v590
    %v592 = vpop.xlane.xlu0 %591
    %v593 = vadd.f32 %v509, %v510
    %594 = vadd.xlane.f32.xlu0 %v593
    %v595 = vpop.xlane.xlu0 %594
    %v596 = vadd.f32 %v511, %v512
    %597 = vadd.xlane.f32.xlu0 %v596
    %v598 = vpop.xlane.xlu0 %597
    %v599 = vadd.f32 %v513, %v514
    %600 = vadd.xlane.f32.xlu0 %v599
    %v601 = vpop.xlane.xlu0 %600
    %v602 = vadd.f32 %v515, %v516
    %603 = vadd.xlane.f32.xlu0 %v602
    %v604 = vpop.xlane.xlu0 %603
    %v605 = vadd.f32 %v517, %v518
    %606 = vadd.xlane.f32.xlu0 %v605
    %v607 = vpop.xlane.xlu0 %606
    %v608 = vadd.f32 %v519, %v520
    %609 = vadd.xlane.f32.xlu0 %v608
    %v610 = vpop.xlane.xlu0 %609
    %v611 = vadd.f32 %v521, %v522
    %612 = vadd.xlane.f32.xlu0 %v611
    %v613 = vpop.xlane.xlu0 %612
    %v614 = vadd.f32 %v523, %v524
    %615 = vadd.xlane.f32.xlu0 %v614
    %v616 = vpop.xlane.xlu0 %615
    %v617 = vadd.f32 %v525, %v526
    %618 = vadd.xlane.f32.xlu0 %v617
    %v619 = vpop.xlane.xlu0 %618
    %v620 = vadd.f32 %v527, %v528
    %621 = vadd.xlane.f32.xlu0 %v620
    %v622 = vpop.xlane.xlu0 %621
    %v623 = vadd.f32 %v529, %v530
    %624 = vadd.xlane.f32.xlu0 %v623
    %v625 = vpop.xlane.xlu0 %624
    %v626 = vadd.f32 %v531, %v532
    %627 = vadd.xlane.f32.xlu0 %v626
    %v628 = vpop.xlane.xlu0 %627
    %v629 = vstv %s72
    %vm630 = vcmp.lt.f32.partialorder %v535, %v629
    %vm631 = vcmp.lt.f32.partialorder %v538, %v629
    %vm632 = vcmp.lt.f32.partialorder %v541, %v629
    %vm633 = vcmp.lt.f32.partialorder %v544, %v629
    %vm634 = vcmp.lt.f32.partialorder %v547, %v629
    %vm635 = vcmp.lt.f32.partialorder %v550, %v629
    %vm636 = vcmp.lt.f32.partialorder %v553, %v629
    %vm637 = vcmp.lt.f32.partialorder %v556, %v629
    %vm638 = vcmp.lt.f32.partialorder %v559, %v629
    %vm639 = vcmp.lt.f32.partialorder %v562, %v629
    %vm640 = vcmp.lt.f32.partialorder %v565, %v629
    %vm641 = vcmp.lt.f32.partialorder %v568, %v629
    %vm642 = vcmp.lt.f32.partialorder %v571, %v629
    %vm643 = vcmp.lt.f32.partialorder %v574, %v629
    %vm644 = vcmp.lt.f32.partialorder %v577, %v629
    %vm645 = vcmp.lt.f32.partialorder %v580, %v629
    %vm646 = vcmp.lt.f32.partialorder %v583, %v629
    %vm647 = vcmp.lt.f32.partialorder %v586, %v629
    %vm648 = vcmp.lt.f32.partialorder %v589, %v629
    %vm649 = vcmp.lt.f32.partialorder %v592, %v629
    %vm650 = vcmp.lt.f32.partialorder %v595, %v629
    %vm651 = vcmp.lt.f32.partialorder %v598, %v629
    %vm652 = vcmp.lt.f32.partialorder %v601, %v629
    %vm653 = vcmp.lt.f32.partialorder %v604, %v629
    %vm654 = vcmp.lt.f32.partialorder %v607, %v629
    %vm655 = vcmp.lt.f32.partialorder %v610, %v629
    %vm656 = vcmp.lt.f32.partialorder %v613, %v629
    %vm657 = vcmp.lt.f32.partialorder %v616, %v629
    %vm658 = vcmp.lt.f32.partialorder %v619, %v629
    %vm659 = vcmp.lt.f32.partialorder %v622, %v629
    %vm660 = vcmp.lt.f32.partialorder %v625, %v629
    %vm661 = vcmp.lt.f32.partialorder %v628, %v629
    %v662 = vsel %vm630, 1, 0
    %v663 = vsel %vm631, 1, 0
    %v664 = vsel %vm632, 1, 0
    %v665 = vsel %vm633, 1, 0
    %v666 = vsel %vm634, 1, 0
    %v667 = vsel %vm635, 1, 0
    %v668 = vsel %vm636, 1, 0
    %v669 = vsel %vm637, 1, 0
    %v670 = vsel %vm638, 1, 0
    %v671 = vsel %vm639, 1, 0
    %v672 = vsel %vm640, 1, 0
    %v673 = vsel %vm641, 1, 0
    %v674 = vsel %vm642, 1, 0
    %v675 = vsel %vm643, 1, 0
    %v676 = vsel %vm644, 1, 0
    %v677 = vsel %vm645, 1, 0
    %v678 = vsel %vm646, 1, 0
    %v679 = vsel %vm647, 1, 0
    %v680 = vsel %vm648, 1, 0
    %v681 = vsel %vm649, 1, 0
    %v682 = vsel %vm650, 1, 0
    %v683 = vsel %vm651, 1, 0
    %v684 = vsel %vm652, 1, 0
    %v685 = vsel %vm653, 1, 0
    %v686 = vsel %vm654, 1, 0
    %v687 = vsel %vm655, 1, 0
    %v688 = vsel %vm656, 1, 0
    %v689 = vsel %vm657, 1, 0
    %v690 = vsel %vm658, 1, 0
    %v691 = vsel %vm659, 1, 0
    %v692 = vsel %vm660, 1, 0
    %v693 = vsel %vm661, 1, 0
    %v694 = vcvt.s32.f32 %v662
    %v695 = vcvt.s32.f32 %v663
    %v696 = vcvt.s32.f32 %v664
    %v697 = vcvt.s32.f32 %v665
    %v698 = vcvt.s32.f32 %v666
    %v699 = vcvt.s32.f32 %v667
    %v700 = vcvt.s32.f32 %v668
    %v701 = vcvt.s32.f32 %v669
    %v702 = vcvt.s32.f32 %v670
    %v703 = vcvt.s32.f32 %v671
    %v704 = vcvt.s32.f32 %v672
    %v705 = vcvt.s32.f32 %v673
    %v706 = vcvt.s32.f32 %v674
    %v707 = vcvt.s32.f32 %v675
    %v708 = vcvt.s32.f32 %v676
    %v709 = vcvt.s32.f32 %v677
    %v710 = vcvt.s32.f32 %v678
    %v711 = vcvt.s32.f32 %v679
    %v712 = vcvt.s32.f32 %v680
    %v713 = vcvt.s32.f32 %v681
    %v714 = vcvt.s32.f32 %v682
    %v715 = vcvt.s32.f32 %v683
    %v716 = vcvt.s32.f32 %v684
    %v717 = vcvt.s32.f32 %v685
    %v718 = vcvt.s32.f32 %v686
    %v719 = vcvt.s32.f32 %v687
    %v720 = vcvt.s32.f32 %v688
    %v721 = vcvt.s32.f32 %v689
    %v722 = vcvt.s32.f32 %v690
    %v723 = vcvt.s32.f32 %v691
    %v724 = vcvt.s32.f32 %v692
    %v725 = vcvt.s32.f32 %v693
    %v726 = vsel %vm109, %v694, 0.0
    %v727 = vsel %vm110, %v694, 0.0
    %v728 = vsel %vm111, %v695, 0.0
    %v729 = vsel %vm112, %v695, 0.0
    %v730 = vsel %vm113, %v696, 0.0
    %v731 = vsel %vm114, %v696, 0.0
    %v732 = vsel %vm115, %v697, 0.0
    %v733 = vsel %vm116, %v697, 0.0
    %v734 = vsel %vm117, %v698, 0.0
    %v735 = vsel %vm118, %v698, 0.0
    %v736 = vsel %vm119, %v699, 0.0
    %v737 = vsel %vm120, %v699, 0.0
    %v738 = vsel %vm121, %v700, 0.0
    %v739 = vsel %vm122, %v700, 0.0
    %v740 = vsel %vm123, %v701, 0.0
    %v741 = vsel %vm124, %v701, 0.0
    %v742 = vsel %vm125, %v702, 0.0
    %v743 = vsel %vm126, %v702, 0.0
    %v744 = vsel %vm127, %v703, 0.0
    %v745 = vsel %vm128, %v703, 0.0
    %v746 = vsel %vm129, %v704, 0.0
    %v747 = vsel %vm130, %v704, 0.0
    %v748 = vsel %vm131, %v705, 0.0
    %v749 = vsel %vm132, %v705, 0.0
    %v750 = vsel %vm133, %v706, 0.0
    %v751 = vsel %vm134, %v706, 0.0
    %v752 = vsel %vm135, %v707, 0.0
    %v753 = vsel %vm136, %v707, 0.0
    %v754 = vsel %vm137, %v708, 0.0
    %v755 = vsel %vm138, %v708, 0.0
    %v756 = vsel %vm139, %v709, 0.0
    %v757 = vsel %vm140, %v709, 0.0
    %v758 = vsel %vm141, %v710, 0.0
    %v759 = vsel %vm142, %v710, 0.0
    %v760 = vsel %vm143, %v711, 0.0
    %v761 = vsel %vm144, %v711, 0.0
    %v762 = vsel %vm145, %v712, 0.0
    %v763 = vsel %vm146, %v712, 0.0
    %v764 = vsel %vm147, %v713, 0.0
    %v765 = vsel %vm148, %v713, 0.0
    %v766 = vsel %vm149, %v714, 0.0
    %v767 = vsel %vm150, %v714, 0.0
    %v768 = vsel %vm151, %v715, 0.0
    %v769 = vsel %vm152, %v715, 0.0
    %v770 = vsel %vm153, %v716, 0.0
    %v771 = vsel %vm154, %v716, 0.0
    %v772 = vsel %vm155, %v717, 0.0
    %v773 = vsel %vm156, %v717, 0.0
    %v774 = vsel %vm157, %v718, 0.0
    %v775 = vsel %vm158, %v718, 0.0
    %v776 = vsel %vm159, %v719, 0.0
    %v777 = vsel %vm160, %v719, 0.0
    %v778 = vsel %vm161, %v720, 0.0
    %v779 = vsel %vm162, %v720, 0.0
    %v780 = vsel %vm163, %v721, 0.0
    %v781 = vsel %vm164, %v721, 0.0
    %v782 = vsel %vm165, %v722, 0.0
    %v783 = vsel %vm166, %v722, 0.0
    %v784 = vsel %vm167, %v723, 0.0
    %v785 = vsel %vm168, %v723, 0.0
    %v786 = vsel %vm169, %v724, 0.0
    %v787 = vsel %vm170, %v724, 0.0
    %v788 = vsel %vm171, %v725, 0.0
    %v789 = vsel %vm172, %v725, 0.0
    %v790 = vadd.f32 %v726, %v728
    %v791 = vadd.f32 %v790, %v730
    %v792 = vadd.f32 %v791, %v732
    %v793 = vadd.f32 %v792, %v734
    %v794 = vadd.f32 %v793, %v736
    %v795 = vadd.f32 %v794, %v738
    %v796 = vadd.f32 %v795, %v740
    %v797 = vadd.f32 %v796, %v742
    %v798 = vadd.f32 %v797, %v744
    %v799 = vadd.f32 %v798, %v746
    %v800 = vadd.f32 %v799, %v748
    %v801 = vadd.f32 %v800, %v750
    %v802 = vadd.f32 %v801, %v752
    %v803 = vadd.f32 %v802, %v754
    %v804 = vadd.f32 %v803, %v756
    %v805 = vadd.f32 %v804, %v758
    %v806 = vadd.f32 %v805, %v760
    %v807 = vadd.f32 %v806, %v762
    %v808 = vadd.f32 %v807, %v764
    %v809 = vadd.f32 %v808, %v766
    %v810 = vadd.f32 %v809, %v768
    %v811 = vadd.f32 %v810, %v770
    %v812 = vadd.f32 %v811, %v772
    %v813 = vadd.f32 %v812, %v774
    %v814 = vadd.f32 %v813, %v776
    %v815 = vadd.f32 %v814, %v778
    %v816 = vadd.f32 %v815, %v780
    %v817 = vadd.f32 %v816, %v782
    %v818 = vadd.f32 %v817, %v784
    %v819 = vadd.f32 %v818, %v786
    %v820 = vadd.f32 %v819, %v788
    %v821 = vrot.slane %v820, 4
    %v822 = vadd.f32 %v820, %v821
    %v823 = vrot.slane %v822, 2
    %v824 = vadd.f32 %v822, %v823
    %v825 = vrot.slane %v824, 1
    %v826 = vadd.f32 %v824, %v825
    %v827 = vadd.f32 %v727, %v729
    %v828 = vadd.f32 %v827, %v731
    %v829 = vadd.f32 %v828, %v733
    %v830 = vadd.f32 %v829, %v735
    %v831 = vadd.f32 %v830, %v737
    %v832 = vadd.f32 %v831, %v739
    %v833 = vadd.f32 %v832, %v741
    %v834 = vadd.f32 %v833, %v743
    %v835 = vadd.f32 %v834, %v745
    %v836 = vadd.f32 %v835, %v747
    %v837 = vadd.f32 %v836, %v749
    %v838 = vadd.f32 %v837, %v751
    %v839 = vadd.f32 %v838, %v753
    %v840 = vadd.f32 %v839, %v755
    %v841 = vadd.f32 %v840, %v757
    %v842 = vadd.f32 %v841, %v759
    %v843 = vadd.f32 %v842, %v761
    %v844 = vadd.f32 %v843, %v763
    %v845 = vadd.f32 %v844, %v765
    %v846 = vadd.f32 %v845, %v767
    %v847 = vadd.f32 %v846, %v769
    %v848 = vadd.f32 %v847, %v771
    %v849 = vadd.f32 %v848, %v773
    %v850 = vadd.f32 %v849, %v775
    %v851 = vadd.f32 %v850, %v777
    %v852 = vadd.f32 %v851, %v779
    %v853 = vadd.f32 %v852, %v781
    %v854 = vadd.f32 %v853, %v783
    %v855 = vadd.f32 %v854, %v785
    %v856 = vadd.f32 %v855, %v787
    %v857 = vadd.f32 %v856, %v789
    %v858 = vrot.slane %v857, 4
    %v859 = vadd.f32 %v857, %v858
    %v860 = vrot.slane %v859, 2
    %v861 = vadd.f32 %v859, %v860
    %v862 = vrot.slane %v861, 1
    %v863 = vadd.f32 %v861, %v862
    %v864 = vsub.f32 1.0, %v9
    %v865 = vsub.f32 1.0, %v41
    %v866 = vmul.f32 %v826, %v864
    %v867 = vmul.f32 %v863, %v865
    %v868 = vadd.f32 %v9, %v866
    %v869 = vadd.f32 %v41, %v867
    %v870 = vsel %vm10, %v868, 0.0
    %v871 = vsel %vm10, %v869, 0.0
    %v872 = vadd.f32 %v870, %v871
    %873 = vadd.xlane.f32.xlu0 %v872
    %v874 = vpop.xlane.xlu0 %873
    %v875 = vrot.slane %v874, 4
    %v876 = vadd.f32 %v874, %v875
    %v877 = vrot.slane %v876, 2
    %v878 = vadd.f32 %v876, %v877
    %v879 = vrot.slane %v878, 1
    %v880 = vadd.f32 %v878, %v879
    %s881 = vtos %v880
    %v884 = vrot.slane %v868, 7
    %v885 = vrot.slane %v869, 7
    %v888 = vmul.f32 %v9, %v884
    %v889 = vmul.f32 %v41, %v885
    %v892 = vrot.slane %v888, 1
    %v893 = vrot.slane %v889, 1
    %v896 = vsel %vm10, %v892, 0.0
    %v897 = vsel %vm10, %v893, 0.0
    %v898 = vadd.f32 %v896, %v897
    %899 = vadd.xlane.f32.xlu0 %v898
    %v900 = vpop.xlane.xlu0 %899
    %v901 = vrot.slane %v900, 4
    %v902 = vadd.f32 %v900, %v901
    %v903 = vrot.slane %v902, 2
    %v904 = vadd.f32 %v902, %v903
    %v905 = vrot.slane %v904, 1
    %v906 = vadd.f32 %v904, %v905
    %s907 = vtos %v906
    %v908 = vstv %s881
    %v909 = vrcp.pop %v908
    %s910 = vtos %v909
    %s911 = smul.f32 %s907, %s910
    %s912 = smul.f32 %s52, 4.0
    %v913 = vstv %s912
    %v914 = vrcp.pop %v913
    %s915 = vtos %v914
    %s916 = smul.f32 %s70, %s915
    %s917 = sadd.f32 %s911, %s916
    %v918 = vstv %s917
    %v919 = vadd.f32 %v918, 0.0
    %920 = vst [vmem:[#allocation2] sm:$0x1] %v919
    // Predicated region
    $region6: #{ssd_loss_pallas.3} parent=1 // pred_check
      _
    $region7: #{ssd_loss_pallas.3} parent=1 // pred_check_branch
      %922 = sbr.rel (0) target = $region9
    $region8: #{ssd_loss_pallas.3} parent=1 // pred_region
      %s924 = ssub.s32 16, 16
      %925 = vsyncadd [#allocation3], %s924
      %s927 = sshll.u32 [#allocation2], 4
      %s928 = int_to_ptr.vmem [resolvable:$true] %s927
      %930 = dma.vmem_to_hbm [thread:$0]  %s928, 16, %s1, [#allocation3]
    $region9: #{ssd_loss_pallas.3} parent=1 // pred_fallthru
      _
    // Predicated region
    $region10: #{ssd_loss_pallas.3} parent=1 // pred_check
      _
    $region11: #{ssd_loss_pallas.3} parent=1 // pred_check_branch
      %932 = sbr.rel (0) target = $region13
    $region12: #{ssd_loss_pallas.3} parent=1 // pred_region
      %933 = dma.done [#allocation3], 16
    $region13: #{ssd_loss_pallas.3} parent=1 // pred_fallthru
      _
    %934 = vsyncpa [#allocation3], 1

</llo_original>
